<compile_context>
chip_gen: v6e
topology: v6e:2x2x1
jax: 0.10.0
libtpu: 0.0.40
codegen_flags: <defaults>
</compile_context>

<pallas_src>
import functools

import jax
import jax.numpy as jnp
from jax.experimental import pallas as pl
from jax.experimental.pallas import tpu as pltpu


def _round_up(x, m):
    return (x + m - 1) // m * m


def _softplus(x):
    # Numerically stable softplus (beta=1), log1p form (matches nn.Softplus).
    return jnp.maximum(x, 0.0) + jnp.log1p(jnp.exp(-jnp.abs(x)))


def _default_use_bf16_act():
    """bf16 transcendentals on v6e/v7x (bf16 VPU/EUP); f32 path on v5e/older."""
    try:
        kind = jax.devices()[0].device_kind.lower()
    except Exception:
        return False
    return any(tag in kind for tag in ("v6", "v7", "7x"))


def _make_generator_kernel(use_bf16_act):
    act_dtype = jnp.bfloat16 if use_bf16_act else jnp.float32

    def kernel(x_ref, w1_ref, s1_ref, t1_ref, w2_ref, s2_ref, t2_ref,
               w3_ref, c3_ref, b3_ref, out_ref):
        x = x_ref[...]                                       # (TB, NZp) bf16

        # Linear(noise,500,bias=False) -> BatchNorm1d(eval) -> Softplus
        z1 = jnp.dot(x, w1_ref[...], preferred_element_type=jnp.float32)
        a1 = (z1 * s1_ref[...] + t1_ref[...]).astype(act_dtype)
        h1 = _softplus(a1).astype(jnp.bfloat16)

        # Linear(500,500,bias=False) -> BatchNorm1d(eval) -> Softplus
        z2 = jnp.dot(h1, w2_ref[...], preferred_element_type=jnp.float32)
        a2 = (z2 * s2_ref[...] + t2_ref[...]).astype(act_dtype)
        h2 = _softplus(a2).astype(jnp.bfloat16)

        # WN_Linear(500, out): (h @ W) * c + b with c folding the weight norm.
        z3 = jnp.dot(h2, w3_ref[...], preferred_element_type=jnp.float32)
        y = (z3 * c3_ref[...] + b3_ref[...]).astype(act_dtype)
        out_ref[...] = jax.nn.sigmoid(y).astype(out_ref.dtype)

    return kernel


def prepare_params(params):
    """One-time parameter prep: fold BN / weight-norm into per-feature affines,
    zero-pad to lane-dense shapes (128 multiples), cast matmul weights to bf16.
    Call once and reuse so the per-call hot path is just the pallas_call."""
    (w1, g1, be1, m1, v1,
     w2, g2, be2, m2, v2,
     w3, ws3, b3) = params

    NZ, H = w1.shape
    OUT = w3.shape[1]
    NZp = _round_up(NZ, 128)
    Hp = _round_up(H, 128)
    OUTp = _round_up(OUT, 128)
    eps_bn = 1e-5

    # Fold BatchNorm1d (eval mode, running stats) into per-feature scale+shift.
    inv1 = g1 / jnp.sqrt(v1 + eps_bn)
    s1 = inv1.astype(jnp.float32)
    t1 = (be1 - m1 * inv1).astype(jnp.float32)
    inv2 = g2 / jnp.sqrt(v2 + eps_bn)
    s2 = inv2.astype(jnp.float32)
    t2 = (be2 - m2 * inv2).astype(jnp.float32)

    # WN_Linear per-output-column normalisation scale (see NOTE in header about
    # computing it from the f32 w3 while the matmul uses bf16-rounded w3).
    c3 = (ws3 / jnp.sqrt(jnp.sum(w3 * w3, axis=0) + 1e-6)).astype(jnp.float32)
    b3f = b3.astype(jnp.float32)

    def pad2(a, r, c):
        return jnp.pad(a, ((0, r - a.shape[0]), (0, c - a.shape[1])))

    def padv(v, n):
        return jnp.pad(v, (0, n - v.shape[0])).reshape(1, n)

    # Zero padding: padded NZ rows see zero noise; padded hidden units give
    # softplus(0)=log 2 but multiply zero-padded rows of W2/W3, so they
    # contribute nothing; padded OUT columns are sliced off after the kernel.
    w1p = pad2(w1, NZp, Hp).astype(jnp.bfloat16)
    w2p = pad2(w2, Hp, Hp).astype(jnp.bfloat16)
    w3p = pad2(w3, Hp, OUTp).astype(jnp.bfloat16)
    s1p, t1p = padv(s1, Hp), padv(t1, Hp)
    s2p, t2p = padv(s2, Hp), padv(t2, Hp)
    c3p, b3p = padv(c3, OUTp), padv(b3f, OUTp)

    return (w1p, s1p, t1p, w2p, s2p, t2p, w3p, c3p, b3p)


def _choose_tb(B):
    B8 = _round_up(max(B, 1), 8)
    TB = min(1024, B8)
    # Give the grid at least 2 steps when there is enough batch so the
    # "parallel" batch axis can feed both TensorCores on multi-core chips (v7x).
    if B8 >= 16 and B8 // TB < 2:
        TB = _round_up(-(-B8 // 2), 8)
    return TB


@functools.partial(
    jax.jit, static_argnames=("out_features", "use_bf16_act", "out_dtype"))
def wn_generator_forward_prepared(prep, noise, *, out_features,
                                  use_bf16_act=False,
                                  out_dtype=jnp.bfloat16):
    """Eval-mode forward: noise (B, noise_size) -> (B, out_features)."""
    (w1p, s1p, t1p, w2p, s2p, t2p, w3p, c3p, b3p) = prep
    B, NZ = noise.shape
    NZp = w1p.shape[0]
    Hp = w1p.shape[1]
    OUTp = w3p.shape[1]

    TB = _choose_tb(B)
    B_pad = _round_up(_round_up(B, 8), TB)

    xb = noise.astype(jnp.bfloat16)
    xb = jnp.pad(xb, ((0, B_pad - B), (0, NZp - NZ)))

    grid = (B_pad // TB,)

    def resident(a):
        return pl.BlockSpec(a.shape, lambda i: (0, 0))

    in_specs = [
        pl.BlockSpec((TB, NZp), lambda i: (i, 0)),       # noise: streamed
        resident(w1p), resident(s1p), resident(t1p),
        resident(w2p), resident(s2p), resident(t2p),
        resident(w3p), resident(c3p), resident(b3p),
    ]
    out_specs = pl.BlockSpec((TB, OUTp), lambda i: (i, 0))
    out_shape = jax.ShapeDtypeStruct((B_pad, OUTp), out_dtype)

    flops = 2 * B_pad * (NZp * Hp + Hp * Hp + Hp * OUTp)
    transcendentals = B_pad * (4 * Hp + OUTp)            # softplus exp/log1p + sigmoid
    out_itemsize = jnp.dtype(out_dtype).itemsize
    bytes_accessed = (xb.size * 2 + B_pad * OUTp * out_itemsize
                      + (w1p.size + w2p.size + w3p.size) * 2
                      + (s1p.size + t1p.size + s2p.size + t2p.size
                         + c3p.size + b3p.size) * 4)

    out = pl.pallas_call(
        _make_generator_kernel(use_bf16_act),
        grid=grid,
        in_specs=in_specs,
        out_specs=out_specs,
        out_shape=out_shape,
        compiler_params=pltpu.CompilerParams(
            dimension_semantics=("parallel",)),
        cost_estimate=pl.CostEstimate(
            flops=int(flops),
            transcendentals=int(transcendentals),
            bytes_accessed=int(bytes_accessed)),
    )(xb, w1p, s1p, t1p, w2p, s2p, t2p, w3p, c3p, b3p)

    return out[:B, :out_features]


def wn_generator_forward(params, noise, *, use_bf16_act=None,
                         out_dtype=jnp.bfloat16):
    """Convenience path.  For repeated calls, run prepare_params() once and use
    wn_generator_forward_prepared() so parameter prep stays off the hot path."""
    if use_bf16_act is None:
        use_bf16_act = _default_use_bf16_act()
    prep = prepare_params(params)
    return wn_generator_forward_prepared(
        prep, noise, out_features=params[10].shape[1],
        use_bf16_act=use_bf16_act, out_dtype=out_dtype)


def _reference_forward(params, noise, *, use_bf16_act, out_dtype=jnp.bfloat16):
    # Pure-JAX reference mirroring the kernel's dtype transitions exactly.
    (w1, g1, be1, m1, v1,
     w2, g2, be2, m2, v2,
     w3, ws3, b3) = params
    act = jnp.bfloat16 if use_bf16_act else jnp.float32
    eps = 1e-5
    inv1 = g1 / jnp.sqrt(v1 + eps)
    s1, t1 = inv1, be1 - m1 * inv1
    inv2 = g2 / jnp.sqrt(v2 + eps)
    s2, t2 = inv2, be2 - m2 * inv2
    c3 = ws3 / jnp.sqrt(jnp.sum(w3 * w3, axis=0) + 1e-6)

    def sp(z):
        return jnp.maximum(z, 0.0) + jnp.log1p(jnp.exp(-jnp.abs(z)))

    x = noise.astype(jnp.bfloat16)
    z1 = jnp.dot(x, w1.astype(jnp.bfloat16), preferred_element_type=jnp.float32)
    h1 = sp((z1 * s1 + t1).astype(act)).astype(jnp.bfloat16)
    z2 = jnp.dot(h1, w2.astype(jnp.bfloat16), preferred_element_type=jnp.float32)
    h2 = sp((z2 * s2 + t2).astype(act)).astype(jnp.bfloat16)
    z3 = jnp.dot(h2, w3.astype(jnp.bfloat16), preferred_element_type=jnp.float32)
    y = (z3 * c3 + b3).astype(act)
    return jax.nn.sigmoid(y).astype(out_dtype)


def init_params(key, noise_size, image_size):
    """Synthetic parameters in transposed (in, out) layout for x @ W."""
    H = 500
    OUT = image_size * image_size
    ks = jax.random.split(key, 13)

    w1 = jax.random.normal(ks[0], (noise_size, H), jnp.float32) * 0.05
    g1 = 1.0 + 0.1 * jax.random.normal(ks[1], (H,), jnp.float32)
    be1 = 0.1 * jax.random.normal(ks[2], (H,), jnp.float32)
    m1 = 0.1 * jax.random.normal(ks[3], (H,), jnp.float32)
    v1 = 1.0 + jax.nn.softplus(jax.random.normal(ks[4], (H,), jnp.float32)) * 0.2

    w2 = jax.random.normal(ks[5], (H, H), jnp.float32) * 0.05
    g2 = 1.0 + 0.1 * jax.random.normal(ks[6], (H,), jnp.float32)
    be2 = 0.1 * jax.random.normal(ks[7], (H,), jnp.float32)
    m2 = 0.1 * jax.random.normal(ks[8], (H,), jnp.float32)
    v2 = 1.0 + jax.nn.softplus(jax.random.normal(ks[9], (H,), jnp.float32)) * 0.2

    # WN_Linear: weight ~ N(0, 0.1), bias = 0, weight_scale = 1 (perturbed here
    # to exercise the train_scale path).
    w3 = jax.random.normal(ks[10], (H, OUT), jnp.float32) * 0.1
    ws3 = 1.0 + 0.1 * jax.random.normal(ks[11], (OUT,), jnp.float32)
    b3 = 0.1 * jax.random.normal(ks[12], (OUT,), jnp.float32)

    return (w1, g1, be1, m1, v1, w2, g2, be2, m2, v2, w3, ws3, b3)


if __name__ == "__main__":
    # Small shapes consistent with the module: MNIST image_size=28, noise_size=100.
    B = 4
    noise_size = 100
    image_size = 28

    key = jax.random.PRNGKey(0)
    k_x, k_p = jax.random.split(key)
    noise = jax.random.normal(k_x, (B, noise_size), jnp.float32)
    params = init_params(k_p, noise_size, image_size)

    use_bf16_act = _default_use_bf16_act()

    # One-time parameter prep (BN/WN folding, lane-dense padding, bf16 cast).
    prep = prepare_params(params)

    out = wn_generator_forward_prepared(
        prep, noise,
        out_features=image_size * image_size,
        use_bf16_act=use_bf16_act,
        out_dtype=jnp.bfloat16)
    jax.block_until_ready(out)

    assert out.shape == (B, image_size * image_size)
    ref = _reference_forward(params, noise, use_bf16_act=use_bf16_act,
                             out_dtype=jnp.bfloat16)
    out_f = jnp.asarray(out, jnp.float32)
    ref_f = jnp.asarray(ref, jnp.float32)
    assert jnp.all(jnp.isfinite(out_f))
    assert jnp.allclose(out_f, ref_f, atol=1e-2, rtol=1e-2), (
        float(jnp.max(jnp.abs(out_f - ref_f))))

    print("KERNEL_OK")
</pallas_src>

<mosaic_0001>
module attributes {stable_mosaic.version = 11 : i64} {
  func.func @kernel(%arg0: i32, %arg1: memref<8x128xbf16, #tpu.memory_space<vmem>>, %arg2: memref<128x512xbf16, #tpu.memory_space<vmem>>, %arg3: memref<1x512xf32, #tpu.memory_space<vmem>>, %arg4: memref<1x512xf32, #tpu.memory_space<vmem>>, %arg5: memref<512x512xbf16, #tpu.memory_space<vmem>>, %arg6: memref<1x512xf32, #tpu.memory_space<vmem>>, %arg7: memref<1x512xf32, #tpu.memory_space<vmem>>, %arg8: memref<512x896xbf16, #tpu.memory_space<vmem>>, %arg9: memref<1x896xf32, #tpu.memory_space<vmem>>, %arg10: memref<1x896xf32, #tpu.memory_space<vmem>>, %arg11: memref<8x896xbf16, #tpu.memory_space<vmem>>) attributes {dimension_semantics = [#tpu.dimension_semantics<parallel>], iteration_bounds = array<i64: 1>, scalar_prefetch = 0 : i64, scratch_operands = 0 : i64, tpu.core_type = #tpu.core_type<tc>, window_params = [{transform_indices = @transform_0, window_bounds = array<i64: 8, 128>}, {pipeline_mode = #tpu.pipeline_mode<synchronous>, transform_indices = @transform_1, window_bounds = array<i64: 128, 512>}, {pipeline_mode = #tpu.pipeline_mode<synchronous>, transform_indices = @transform_2, window_bounds = array<i64: 1, 512>}, {pipeline_mode = #tpu.pipeline_mode<synchronous>, transform_indices = @transform_3, window_bounds = array<i64: 1, 512>}, {pipeline_mode = #tpu.pipeline_mode<synchronous>, transform_indices = @transform_4, window_bounds = array<i64: 512, 512>}, {pipeline_mode = #tpu.pipeline_mode<synchronous>, transform_indices = @transform_5, window_bounds = array<i64: 1, 512>}, {pipeline_mode = #tpu.pipeline_mode<synchronous>, transform_indices = @transform_6, window_bounds = array<i64: 1, 512>}, {pipeline_mode = #tpu.pipeline_mode<synchronous>, transform_indices = @transform_7, window_bounds = array<i64: 512, 896>}, {pipeline_mode = #tpu.pipeline_mode<synchronous>, transform_indices = @transform_8, window_bounds = array<i64: 1, 896>}, {pipeline_mode = #tpu.pipeline_mode<synchronous>, transform_indices = @transform_9, window_bounds = array<i64: 1, 896>}, {transform_indices = @transform_10, window_bounds = array<i64: 8, 896>}]} {
    %c0 = arith.constant 0 : index
    %c0_0 = arith.constant 0 : index
    %0 = vector.load %arg1[%c0, %c0_0] : memref<8x128xbf16, #tpu.memory_space<vmem>>, vector<8x128xbf16>
    %c0_1 = arith.constant 0 : index
    %c0_2 = arith.constant 0 : index
    %1 = vector.load %arg2[%c0_1, %c0_2] : memref<128x512xbf16, #tpu.memory_space<vmem>>, vector<128x512xbf16>
    %cst = arith.constant dense<0.000000e+00> : vector<8x512xf32>
    %2 = tpu.matmul %0, %1, %cst {dimension_numbers = #tpu.dot_dimension_numbers<[1], [0], [0], [1], [0, 0, 1, 1], [], []>} : vector<8x128xbf16>, vector<128x512xbf16>, vector<8x512xf32> -> vector<8x512xf32>
    %c0_3 = arith.constant 0 : index
    %c0_4 = arith.constant 0 : index
    %3 = vector.load %arg3[%c0_3, %c0_4] : memref<1x512xf32, #tpu.memory_space<vmem>>, vector<1x512xf32>
    %4 = vector.broadcast %3 : vector<1x512xf32> to vector<8x512xf32>
    %5 = arith.mulf %2, %4 : vector<8x512xf32>
    %c0_5 = arith.constant 0 : index
    %c0_6 = arith.constant 0 : index
    %6 = vector.load %arg4[%c0_5, %c0_6] : memref<1x512xf32, #tpu.memory_space<vmem>>, vector<1x512xf32>
    %7 = vector.broadcast %6 : vector<1x512xf32> to vector<8x512xf32>
    %8 = arith.addf %5, %7 : vector<8x512xf32>
    %cst_7 = arith.constant 0.000000e+00 : f32
    %9 = vector.broadcast %cst_7 : f32 to vector<8x512xf32>
    %10 = arith.maximumf %8, %9 : vector<8x512xf32>
    %11 = math.absf %8 : vector<8x512xf32>
    %cst_8 = arith.constant 0.000000e+00 : f32
    %12 = vector.broadcast %cst_8 : f32 to vector<8x512xf32>
    %13 = arith.subf %12, %11 : vector<8x512xf32>
    %14 = math.exp %13 : vector<8x512xf32>
    %15 = math.log1p %14 : vector<8x512xf32>
    %16 = arith.addf %10, %15 : vector<8x512xf32>
    %17 = arith.truncf %16 : vector<8x512xf32> to vector<8x512xbf16>
    %c0_9 = arith.constant 0 : index
    %c0_10 = arith.constant 0 : index
    %18 = vector.load %arg5[%c0_9, %c0_10] : memref<512x512xbf16, #tpu.memory_space<vmem>>, vector<512x512xbf16>
    %cst_11 = arith.constant dense<0.000000e+00> : vector<8x512xf32>
    %19 = tpu.matmul %17, %18, %cst_11 {dimension_numbers = #tpu.dot_dimension_numbers<[1], [0], [0], [1], [0, 0, 1, 1], [], []>} : vector<8x512xbf16>, vector<512x512xbf16>, vector<8x512xf32> -> vector<8x512xf32>
    %c0_12 = arith.constant 0 : index
    %c0_13 = arith.constant 0 : index
    %20 = vector.load %arg6[%c0_12, %c0_13] : memref<1x512xf32, #tpu.memory_space<vmem>>, vector<1x512xf32>
    %21 = vector.broadcast %20 : vector<1x512xf32> to vector<8x512xf32>
    %22 = arith.mulf %19, %21 : vector<8x512xf32>
    %c0_14 = arith.constant 0 : index
    %c0_15 = arith.constant 0 : index
    %23 = vector.load %arg7[%c0_14, %c0_15] : memref<1x512xf32, #tpu.memory_space<vmem>>, vector<1x512xf32>
    %24 = vector.broadcast %23 : vector<1x512xf32> to vector<8x512xf32>
    %25 = arith.addf %22, %24 : vector<8x512xf32>
    %cst_16 = arith.constant 0.000000e+00 : f32
    %26 = vector.broadcast %cst_16 : f32 to vector<8x512xf32>
    %27 = arith.maximumf %25, %26 : vector<8x512xf32>
    %28 = math.absf %25 : vector<8x512xf32>
    %cst_17 = arith.constant 0.000000e+00 : f32
    %29 = vector.broadcast %cst_17 : f32 to vector<8x512xf32>
    %30 = arith.subf %29, %28 : vector<8x512xf32>
    %31 = math.exp %30 : vector<8x512xf32>
    %32 = math.log1p %31 : vector<8x512xf32>
    %33 = arith.addf %27, %32 : vector<8x512xf32>
    %34 = arith.truncf %33 : vector<8x512xf32> to vector<8x512xbf16>
    %c0_18 = arith.constant 0 : index
    %c0_19 = arith.constant 0 : index
    %35 = vector.load %arg8[%c0_18, %c0_19] : memref<512x896xbf16, #tpu.memory_space<vmem>>, vector<512x896xbf16>
    %cst_20 = arith.constant dense<0.000000e+00> : vector<8x896xf32>
    %36 = tpu.matmul %34, %35, %cst_20 {dimension_numbers = #tpu.dot_dimension_numbers<[1], [0], [0], [1], [0, 0, 1, 1], [], []>} : vector<8x512xbf16>, vector<512x896xbf16>, vector<8x896xf32> -> vector<8x896xf32>
    %c0_21 = arith.constant 0 : index
    %c0_22 = arith.constant 0 : index
    %37 = vector.load %arg9[%c0_21, %c0_22] : memref<1x896xf32, #tpu.memory_space<vmem>>, vector<1x896xf32>
    %38 = vector.broadcast %37 : vector<1x896xf32> to vector<8x896xf32>
    %39 = arith.mulf %36, %38 : vector<8x896xf32>
    %c0_23 = arith.constant 0 : index
    %c0_24 = arith.constant 0 : index
    %40 = vector.load %arg10[%c0_23, %c0_24] : memref<1x896xf32, #tpu.memory_space<vmem>>, vector<1x896xf32>
    %41 = vector.broadcast %40 : vector<1x896xf32> to vector<8x896xf32>
    %42 = arith.addf %39, %41 : vector<8x896xf32>
    %43 = arith.negf %42 : vector<8x896xf32>
    %44 = math.exp %43 : vector<8x896xf32>
    %cst_25 = arith.constant 1.000000e+00 : f32
    %45 = vector.broadcast %cst_25 : f32 to vector<8x896xf32>
    %46 = arith.addf %45, %44 : vector<8x896xf32>
    %47 = arith.divf %45, %46 : vector<8x896xf32>
    %48 = arith.truncf %47 : vector<8x896xf32> to vector<8x896xbf16>
    %c0_26 = arith.constant 0 : index
    %c0_27 = arith.constant 0 : index
    %49 = vector.load %arg11[%c0_26, %c0_27] : memref<8x896xbf16, #tpu.memory_space<vmem>>, vector<8x896xbf16>
    tpu.vector_store %arg11[%c0_26, %c0_27], %48 {strides = array<i32>} : memref<8x896xbf16, #tpu.memory_space<vmem>>, vector<8x896xbf16>,
    return
  }
  func.func @transform_0(%arg0: i32) -> (i32, i32) {
    %c0_i32 = arith.constant 0 : i32
    %c0_i32_0 = arith.constant 0 : i32
    return %arg0, %c0_i32 : i32, i32
  }
  func.func @transform_1(%arg0: i32) -> (i32, i32) {
    %c0_i32 = arith.constant 0 : i32
    %c0_i32_0 = arith.constant 0 : i32
    %c0_i32_1 = arith.constant 0 : i32
    return %c0_i32, %c0_i32_0 : i32, i32
  }
  func.func @transform_2(%arg0: i32) -> (i32, i32) {
    %c0_i32 = arith.constant 0 : i32
    %c0_i32_0 = arith.constant 0 : i32
    %c0_i32_1 = arith.constant 0 : i32
    return %c0_i32, %c0_i32_0 : i32, i32
  }
  func.func @transform_3(%arg0: i32) -> (i32, i32) {
    %c0_i32 = arith.constant 0 : i32
    %c0_i32_0 = arith.constant 0 : i32
    %c0_i32_1 = arith.constant 0 : i32
    return %c0_i32, %c0_i32_0 : i32, i32
  }
  func.func @transform_4(%arg0: i32) -> (i32, i32) {
    %c0_i32 = arith.constant 0 : i32
    %c0_i32_0 = arith.constant 0 : i32
    %c0_i32_1 = arith.constant 0 : i32
    return %c0_i32, %c0_i32_0 : i32, i32
  }
  func.func @transform_5(%arg0: i32) -> (i32, i32) {
    %c0_i32 = arith.constant 0 : i32
    %c0_i32_0 = arith.constant 0 : i32
    %c0_i32_1 = arith.constant 0 : i32
    return %c0_i32, %c0_i32_0 : i32, i32
  }
  func.func @transform_6(%arg0: i32) -> (i32, i32) {
    %c0_i32 = arith.constant 0 : i32
    %c0_i32_0 = arith.constant 0 : i32
    %c0_i32_1 = arith.constant 0 : i32
    return %c0_i32, %c0_i32_0 : i32, i32
  }
  func.func @transform_7(%arg0: i32) -> (i32, i32) {
    %c0_i32 = arith.constant 0 : i32
    %c0_i32_0 = arith.constant 0 : i32
    %c0_i32_1 = arith.constant 0 : i32
    return %c0_i32, %c0_i32_0 : i32, i32
  }
  func.func @transform_8(%arg0: i32) -> (i32, i32) {
    %c0_i32 = arith.constant 0 : i32
    %c0_i32_0 = arith.constant 0 : i32
    %c0_i32_1 = arith.constant 0 : i32
    return %c0_i32, %c0_i32_0 : i32, i32
  }
  func.func @transform_9(%arg0: i32) -> (i32, i32) {
    %c0_i32 = arith.constant 0 : i32
    %c0_i32_0 = arith.constant 0 : i32
    %c0_i32_1 = arith.constant 0 : i32
    return %c0_i32, %c0_i32_0 : i32, i32
  }
  func.func @transform_10(%arg0: i32) -> (i32, i32) {
    %c0_i32 = arith.constant 0 : i32
    %c0_i32_0 = arith.constant 0 : i32
    return %arg0, %c0_i32 : i32, i32
  }
}

</mosaic_0001>

<llo_original>
// kernel: wn_generator_forward_prepared.1
$region0: #{wn_generator_forward_prepared.1}
  #allocation0 [shape = 'u32[]', space=smem, size = 0x4, offset = 0x4, fixed_abs, tag = 'smem constant byte address 0x4 - core index']
  #allocation1 [shape = 'u32[144,128]{1,0:T(1,128)}', space=vmem, size = 0x12000, scoped, tag = 'internal scratch']
  %s0 = inlined_call_operand.vmem [shape: bf16[8,128], index: 0, kind: input, shape index: {}]
  %s1 = inlined_call_operand.hbm [shape: bf16[128,512], index: 1, kind: input, shape index: {}]
  %s2 = inlined_call_operand.hbm [shape: f32[1,512], index: 2, kind: input, shape index: {}]
  %s3 = inlined_call_operand.hbm [shape: f32[1,512], index: 3, kind: input, shape index: {}]
  %s4 = inlined_call_operand.hbm [shape: bf16[512,512], index: 4, kind: input, shape index: {}]
  %s5 = inlined_call_operand.hbm [shape: f32[1,512], index: 5, kind: input, shape index: {}]
  %s6 = inlined_call_operand.vmem [shape: f32[1,512], index: 6, kind: input, shape index: {}]
  %s7 = inlined_call_operand.hbm [shape: bf16[512,896], index: 7, kind: input, shape index: {}]
  %s8 = inlined_call_operand.vmem [shape: f32[1,896], index: 8, kind: input, shape index: {}]
  %s9 = inlined_call_operand.vmem [shape: f32[1,896], index: 9, kind: input, shape index: {}]
  %s10 = inlined_call_operand.vmem [shape: bf16[8,896], index: 10, kind: output, shape index: {}]
  %s11 = sld [smem:[#allocation0]]
  $region74: #{wn_generator_forward_prepared.1} parent=0
    _
  %s13 = ssub.s32 1, %s11
  %s14 = scalar_select 0, %s13, %s11
  $region1: #{wn_generator_forward_prepared.1} parent=0
    #allocation2 [shape = 'u8[131072]{0}', space=vmem, size = 0x20000, scoped, tag = 'input window, operand 1, single buffered']
    #allocation3 [shape = 's32[1]{0}', space=sflag, size = 0x4, scoped, tag = 'scoped memory for wn_generator_forward_prepared.1']
    #allocation4 [shape = 'u8[2048]{0}', space=vmem, size = 0x800, scoped, tag = 'input window, operand 2, single buffered']
    #allocation5 [shape = 's32[1]{0}', space=sflag, size = 0x4, scoped, tag = 'scoped memory for wn_generator_forward_prepared.1']
    #allocation6 [shape = 'u8[2048]{0}', space=vmem, size = 0x800, scoped, tag = 'input window, operand 3, single buffered']
    #allocation7 [shape = 'u8[524288]{0}', space=vmem, size = 0x80000, scoped, tag = 'input window, operand 4, single buffered']
    #allocation8 [shape = 's32[1]{0}', space=sflag, size = 0x4, scoped, tag = 'scoped memory for wn_generator_forward_prepared.1']
    #allocation9 [shape = 'u8[2048]{0}', space=vmem, size = 0x800, scoped, tag = 'input window, operand 5, single buffered']
    #allocation10 [shape = 'u8[917504]{0}', space=vmem, size = 0xe0000, scoped, tag = 'input window, operand 7, single buffered']
    #allocation11 [shape = 's32[1]{0}', space=sflag, size = 0x4, scoped, tag = 'scoped memory for wn_generator_forward_prepared.1']
    %15 = vsyncpa [#allocation3], 0
    %16 = vsyncpa [#allocation5], 0
    %17 = vsyncpa [#allocation8], 0
    %18 = vsyncpa [#allocation11], 0
    // Predicated region
    $region2: #{wn_generator_forward_prepared.1} parent=1 // pred_check
      _
    $region3: #{wn_generator_forward_prepared.1} parent=1 // pred_check_branch
      %20 = sbr.rel (0) target = $region5
    $region4: #{wn_generator_forward_prepared.1} parent=1 // pred_region
      _
    $region5: #{wn_generator_forward_prepared.1} parent=1 // pred_fallthru
      _
    // Predicated region
    $region6: #{wn_generator_forward_prepared.1} parent=1 // pred_check
      _
    $region7: #{wn_generator_forward_prepared.1} parent=1 // pred_check_branch
      %22 = sbr.rel (0) target = $region9
    $region8: #{wn_generator_forward_prepared.1} parent=1 // pred_region
      %s24 = ssub.s32 4096, 4096
      %25 = vsyncadd [#allocation3], %s24
      %s26 = sshll.u32 [#allocation2], 4
      %s27 = int_to_ptr.vmem [resolvable:$true] %s26
      %32 = dma.hbm_to_vmem [thread:$0]  %s1, 4096, %s27, [#allocation3], 256, 256, 16
    $region9: #{wn_generator_forward_prepared.1} parent=1 // pred_fallthru
      _
    // Predicated region
    $region10: #{wn_generator_forward_prepared.1} parent=1 // pred_check
      _
    $region11: #{wn_generator_forward_prepared.1} parent=1 // pred_check_branch
      %34 = sbr.rel (0) target = $region13
    $region12: #{wn_generator_forward_prepared.1} parent=1 // pred_region
      %s36 = ssub.s32 64, 64
      %37 = vsyncadd [#allocation5], %s36
      %s39 = sshll.u32 [#allocation4], 4
      %s40 = int_to_ptr.vmem [resolvable:$true] %s39
      %42 = dma.hbm_to_vmem [thread:$0]  %s2, 64, %s40, [#allocation5]
    $region13: #{wn_generator_forward_prepared.1} parent=1 // pred_fallthru
      _
    // Predicated region
    $region14: #{wn_generator_forward_prepared.1} parent=1 // pred_check
      _
    $region15: #{wn_generator_forward_prepared.1} parent=1 // pred_check_branch
      %44 = sbr.rel (0) target = $region17
    $region16: #{wn_generator_forward_prepared.1} parent=1 // pred_region
      %s46 = ssub.s32 64, 64
      %47 = vsyncadd [#allocation5], %s46
      %s49 = sshll.u32 [#allocation6], 4
      %s50 = int_to_ptr.vmem [resolvable:$true] %s49
      %52 = dma.hbm_to_vmem [thread:$0]  %s3, 64, %s50, [#allocation5]
    $region17: #{wn_generator_forward_prepared.1} parent=1 // pred_fallthru
      _
    // Predicated region
    $region18: #{wn_generator_forward_prepared.1} parent=1 // pred_check
      _
    $region19: #{wn_generator_forward_prepared.1} parent=1 // pred_check_branch
      %54 = sbr.rel (0) target = $region21
    $region20: #{wn_generator_forward_prepared.1} parent=1 // pred_region
      %s56 = ssub.s32 16384, 16384
      %57 = vsyncadd [#allocation8], %s56
      %s58 = sshll.u32 [#allocation7], 4
      %s59 = int_to_ptr.vmem [resolvable:$true] %s58
      %64 = dma.hbm_to_vmem [thread:$0]  %s4, 16384, %s59, [#allocation8], 256, 256, 16
    $region21: #{wn_generator_forward_prepared.1} parent=1 // pred_fallthru
      _
    // Predicated region
    $region22: #{wn_generator_forward_prepared.1} parent=1 // pred_check
      _
    $region23: #{wn_generator_forward_prepared.1} parent=1 // pred_check_branch
      %66 = sbr.rel (0) target = $region25
    $region24: #{wn_generator_forward_prepared.1} parent=1 // pred_region
      %s68 = ssub.s32 64, 64
      %69 = vsyncadd [#allocation8], %s68
      %s71 = sshll.u32 [#allocation9], 4
      %s72 = int_to_ptr.vmem [resolvable:$true] %s71
      %74 = dma.hbm_to_vmem [thread:$0]  %s5, 64, %s72, [#allocation8]
    $region25: #{wn_generator_forward_prepared.1} parent=1 // pred_fallthru
      _
    // Predicated region
    $region26: #{wn_generator_forward_prepared.1} parent=1 // pred_check
      _
    $region27: #{wn_generator_forward_prepared.1} parent=1 // pred_check_branch
      %76 = sbr.rel (0) target = $region29
    $region28: #{wn_generator_forward_prepared.1} parent=1 // pred_region
      _
    $region29: #{wn_generator_forward_prepared.1} parent=1 // pred_fallthru
      _
    // Predicated region
    $region30: #{wn_generator_forward_prepared.1} parent=1 // pred_check
      _
    $region31: #{wn_generator_forward_prepared.1} parent=1 // pred_check_branch
      %78 = sbr.rel (0) target = $region33
    $region32: #{wn_generator_forward_prepared.1} parent=1 // pred_region
      %s80 = ssub.s32 28672, 28672
      %81 = vsyncadd [#allocation11], %s80
      %s82 = sshll.u32 [#allocation10], 4
      %s83 = int_to_ptr.vmem [resolvable:$true] %s82
      %88 = dma.hbm_to_vmem [thread:$0]  %s7, 28672, %s83, [#allocation11], 448, 448, 28
    $region33: #{wn_generator_forward_prepared.1} parent=1 // pred_fallthru
      _
    // Predicated region
    $region34: #{wn_generator_forward_prepared.1} parent=1 // pred_check
      _
    $region35: #{wn_generator_forward_prepared.1} parent=1 // pred_check_branch
      %90 = sbr.rel (0) target = $region37
    $region36: #{wn_generator_forward_prepared.1} parent=1 // pred_region
      _
    $region37: #{wn_generator_forward_prepared.1} parent=1 // pred_fallthru
      _
    // Predicated region
    $region38: #{wn_generator_forward_prepared.1} parent=1 // pred_check
      _
    $region39: #{wn_generator_forward_prepared.1} parent=1 // pred_check_branch
      %92 = sbr.rel (0) target = $region41
    $region40: #{wn_generator_forward_prepared.1} parent=1 // pred_region
      _
    $region41: #{wn_generator_forward_prepared.1} parent=1 // pred_fallthru
      _
    // Predicated region
    $region42: #{wn_generator_forward_prepared.1} parent=1 // pred_check
      _
    $region43: #{wn_generator_forward_prepared.1} parent=1 // pred_check_branch
      %94 = sbr.rel (0) target = $region45
    $region44: #{wn_generator_forward_prepared.1} parent=1 // pred_region
      %95 = dma.done [#allocation3], 4096
    $region45: #{wn_generator_forward_prepared.1} parent=1 // pred_fallthru
      _
    // Predicated region
    $region46: #{wn_generator_forward_prepared.1} parent=1 // pred_check
      _
    $region47: #{wn_generator_forward_prepared.1} parent=1 // pred_check_branch
      %97 = sbr.rel (0) target = $region49
    $region48: #{wn_generator_forward_prepared.1} parent=1 // pred_region
      %98 = dma.done [#allocation5], 64
    $region49: #{wn_generator_forward_prepared.1} parent=1 // pred_fallthru
      _
    // Predicated region
    $region50: #{wn_generator_forward_prepared.1} parent=1 // pred_check
      _
    $region51: #{wn_generator_forward_prepared.1} parent=1 // pred_check_branch
      %100 = sbr.rel (0) target = $region53
    $region52: #{wn_generator_forward_prepared.1} parent=1 // pred_region
      %101 = dma.done [#allocation5], 64
    $region53: #{wn_generator_forward_prepared.1} parent=1 // pred_fallthru
      _
    // Predicated region
    $region54: #{wn_generator_forward_prepared.1} parent=1 // pred_check
      _
    $region55: #{wn_generator_forward_prepared.1} parent=1 // pred_check_branch
      %103 = sbr.rel (0) target = $region57
    $region56: #{wn_generator_forward_prepared.1} parent=1 // pred_region
      %104 = dma.done [#allocation8], 16384
    $region57: #{wn_generator_forward_prepared.1} parent=1 // pred_fallthru
      _
    // Predicated region
    $region58: #{wn_generator_forward_prepared.1} parent=1 // pred_check
      _
    $region59: #{wn_generator_forward_prepared.1} parent=1 // pred_check_branch
      %106 = sbr.rel (0) target = $region61
    $region60: #{wn_generator_forward_prepared.1} parent=1 // pred_region
      %107 = dma.done [#allocation8], 64
    $region61: #{wn_generator_forward_prepared.1} parent=1 // pred_fallthru
      _
    // Predicated region
    $region62: #{wn_generator_forward_prepared.1} parent=1 // pred_check
      _
    $region63: #{wn_generator_forward_prepared.1} parent=1 // pred_check_branch
      %109 = sbr.rel (0) target = $region65
    $region64: #{wn_generator_forward_prepared.1} parent=1 // pred_region
      %110 = dma.done [#allocation11], 28672
    $region65: #{wn_generator_forward_prepared.1} parent=1 // pred_fallthru
      _
    %v112 = vld [vmem:[%s0] sm:$0xf]
    %v113 = vld [vmem:[#allocation2] sm:$0xff]
    %v114 = vld [vmem:[#allocation2 + $0x8] sm:$0xff]
    %v115 = vld [vmem:[#allocation2 + $0x10] sm:$0xff]
    %v116 = vld [vmem:[#allocation2 + $0x18] sm:$0xff]
    %v117 = vld [vmem:[#allocation2 + $0x20] sm:$0xff]
    %v118 = vld [vmem:[#allocation2 + $0x28] sm:$0xff]
    %v119 = vld [vmem:[#allocation2 + $0x30] sm:$0xff]
    %v120 = vld [vmem:[#allocation2 + $0x38] sm:$0xff]
    %v121 = vld [vmem:[#allocation2 + $0x40] sm:$0xff]
    %v122 = vld [vmem:[#allocation2 + $0x48] sm:$0xff]
    %v123 = vld [vmem:[#allocation2 + $0x50] sm:$0xff]
    %v124 = vld [vmem:[#allocation2 + $0x58] sm:$0xff]
    %v125 = vld [vmem:[#allocation2 + $0x60] sm:$0xff]
    %v126 = vld [vmem:[#allocation2 + $0x68] sm:$0xff]
    %v127 = vld [vmem:[#allocation2 + $0x70] sm:$0xff]
    %v128 = vld [vmem:[#allocation2 + $0x78] sm:$0xff]
    %v129 = vld [vmem:[#allocation2 + $0x80] sm:$0xff]
    %v130 = vld [vmem:[#allocation2 + $0x88] sm:$0xff]
    %v131 = vld [vmem:[#allocation2 + $0x90] sm:$0xff]
    %v132 = vld [vmem:[#allocation2 + $0x98] sm:$0xff]
    %v133 = vld [vmem:[#allocation2 + $0xa0] sm:$0xff]
    %v134 = vld [vmem:[#allocation2 + $0xa8] sm:$0xff]
    %v135 = vld [vmem:[#allocation2 + $0xb0] sm:$0xff]
    %v136 = vld [vmem:[#allocation2 + $0xb8] sm:$0xff]
    %v137 = vld [vmem:[#allocation2 + $0xc0] sm:$0xff]
    %v138 = vld [vmem:[#allocation2 + $0xc8] sm:$0xff]
    %v139 = vld [vmem:[#allocation2 + $0xd0] sm:$0xff]
    %v140 = vld [vmem:[#allocation2 + $0xd8] sm:$0xff]
    %v141 = vld [vmem:[#allocation2 + $0xe0] sm:$0xff]
    %v142 = vld [vmem:[#allocation2 + $0xe8] sm:$0xff]
    %v143 = vld [vmem:[#allocation2 + $0xf0] sm:$0xff]
    %v144 = vld [vmem:[#allocation2 + $0xf8] sm:$0xff]
    %v177 = vunpack.c.l.b16 %v113
    %v178 = vunpack.c.h.b16 %v113
    %v179 = vunpack.c.l.b16 %v114
    %v180 = vunpack.c.h.b16 %v114
    %v181 = vunpack.c.l.b16 %v115
    %v182 = vunpack.c.h.b16 %v115
    %v183 = vunpack.c.l.b16 %v116
    %v184 = vunpack.c.h.b16 %v116
    %v185 = vunpack.c.l.b16 %v117
    %v186 = vunpack.c.h.b16 %v117
    %v187 = vunpack.c.l.b16 %v118
    %v188 = vunpack.c.h.b16 %v118
    %v189 = vunpack.c.l.b16 %v119
    %v190 = vunpack.c.h.b16 %v119
    %v191 = vunpack.c.l.b16 %v120
    %v192 = vunpack.c.h.b16 %v120
    %v193 = vunpack.c.l.b16 %v121
    %v194 = vunpack.c.h.b16 %v121
    %v195 = vunpack.c.l.b16 %v122
    %v196 = vunpack.c.h.b16 %v122
    %v197 = vunpack.c.l.b16 %v123
    %v198 = vunpack.c.h.b16 %v123
    %v199 = vunpack.c.l.b16 %v124
    %v200 = vunpack.c.h.b16 %v124
    %v201 = vunpack.c.l.b16 %v125
    %v202 = vunpack.c.h.b16 %v125
    %v203 = vunpack.c.l.b16 %v126
    %v204 = vunpack.c.h.b16 %v126
    %v205 = vunpack.c.l.b16 %v127
    %v206 = vunpack.c.h.b16 %v127
    %v207 = vunpack.c.l.b16 %v128
    %v208 = vunpack.c.h.b16 %v128
    %v209 = vunpack.c.l.b16 %v129
    %v210 = vunpack.c.h.b16 %v129
    %v211 = vunpack.c.l.b16 %v130
    %v212 = vunpack.c.h.b16 %v130
    %v213 = vunpack.c.l.b16 %v131
    %v214 = vunpack.c.h.b16 %v131
    %v215 = vunpack.c.l.b16 %v132
    %v216 = vunpack.c.h.b16 %v132
    %v217 = vunpack.c.l.b16 %v133
    %v218 = vunpack.c.h.b16 %v133
    %v219 = vunpack.c.l.b16 %v134
    %v220 = vunpack.c.h.b16 %v134
    %v221 = vunpack.c.l.b16 %v135
    %v222 = vunpack.c.h.b16 %v135
    %v223 = vunpack.c.l.b16 %v136
    %v224 = vunpack.c.h.b16 %v136
    %v225 = vunpack.c.l.b16 %v137
    %v226 = vunpack.c.h.b16 %v137
    %v227 = vunpack.c.l.b16 %v138
    %v228 = vunpack.c.h.b16 %v138
    %v229 = vunpack.c.l.b16 %v139
    %v230 = vunpack.c.h.b16 %v139
    %v231 = vunpack.c.l.b16 %v140
    %v232 = vunpack.c.h.b16 %v140
    %v233 = vunpack.c.l.b16 %v141
    %v234 = vunpack.c.h.b16 %v141
    %v235 = vunpack.c.l.b16 %v142
    %v236 = vunpack.c.h.b16 %v142
    %v237 = vunpack.c.l.b16 %v143
    %v238 = vunpack.c.h.b16 %v143
    %v239 = vunpack.c.l.b16 %v144
    %v240 = vunpack.c.h.b16 %v144
    %v241 = vpack.c.b16 %v181, %v177
    %v242 = vpack.c.b16 %v182, %v178
    %v243 = vpack.c.b16 %v183, %v179
    %v244 = vpack.c.b16 %v184, %v180
    %v245 = vpack.c.b16 %v189, %v185
    %v246 = vpack.c.b16 %v190, %v186
    %v247 = vpack.c.b16 %v191, %v187
    %v248 = vpack.c.b16 %v192, %v188
    %v249 = vpack.c.b16 %v197, %v193
    %v250 = vpack.c.b16 %v198, %v194
    %v251 = vpack.c.b16 %v199, %v195
    %v252 = vpack.c.b16 %v200, %v196
    %v253 = vpack.c.b16 %v205, %v201
    %v254 = vpack.c.b16 %v206, %v202
    %v255 = vpack.c.b16 %v207, %v203
    %v256 = vpack.c.b16 %v208, %v204
    %v257 = vpack.c.b16 %v213, %v209
    %v258 = vpack.c.b16 %v214, %v210
    %v259 = vpack.c.b16 %v215, %v211
    %v260 = vpack.c.b16 %v216, %v212
    %v261 = vpack.c.b16 %v221, %v217
    %v262 = vpack.c.b16 %v222, %v218
    %v263 = vpack.c.b16 %v223, %v219
    %v264 = vpack.c.b16 %v224, %v220
    %v265 = vpack.c.b16 %v229, %v225
    %v266 = vpack.c.b16 %v230, %v226
    %v267 = vpack.c.b16 %v231, %v227
    %v268 = vpack.c.b16 %v232, %v228
    %v269 = vpack.c.b16 %v237, %v233
    %v270 = vpack.c.b16 %v238, %v234
    %v271 = vpack.c.b16 %v239, %v235
    %v272 = vpack.c.b16 %v240, %v236
    %305 = vmatprep.subr.bf16.mxu0 %v270
    %306 = vmatpush1.bf16.msra.mxu0 %v269
    %307 = vmatprep.subr.bf16.mxu0 %v266
    %308 = vmatpush1.bf16.msra.mxu0 %v265
    %309 = vmatprep.subr.bf16.mxu0 %v262
    %310 = vmatpush1.bf16.msra.mxu0 %v261
    %311 = vmatprep.subr.bf16.mxu0 %v258
    %312 = vmatpush1.bf16.msra.mxu0 %v257
    %313 = vmatprep.subr.bf16.mxu0 %v254
    %314 = vmatpush1.bf16.msra.mxu0 %v253
    %315 = vmatprep.subr.bf16.mxu0 %v250
    %316 = vmatpush1.bf16.msra.mxu0 %v249
    %317 = vmatprep.subr.bf16.mxu0 %v246
    %318 = vmatpush1.bf16.msra.mxu0 %v245
    %319 = vmatprep.subr.bf16.mxu0 %v242
    %320 = vmatpush1.bf16.msra.mxu0 %v241
    %321 = vmatprep.subr.bf16.mxu0 0
    %322 = vmatpush2.bf16.msra.mxu0 0
    %323 = vmatprep.subr.bf16.mxu0 0
    %324 = vmatpush2.bf16.msra.mxu0 0
    %325 = vmatprep.subr.bf16.mxu0 0
    %326 = vmatpush2.bf16.msra.mxu0 0
    %327 = vmatprep.subr.bf16.mxu0 0
    %328 = vmatpush2.bf16.msra.mxu0 0
    %329 = vmatprep.subr.bf16.mxu0 0
    %330 = vmatpush2.bf16.msra.mxu0 0
    %331 = vmatprep.subr.bf16.mxu0 0
    %332 = vmatpush2.bf16.msra.mxu0 0
    %333 = vmatprep.subr.bf16.mxu0 0
    %334 = vmatpush2.bf16.msra.mxu0 0
    %335 = vmatprep.subr.bf16.mxu0 0
    %336 = vmatpush2.bf16.msra.mxu0 0
    %337 = vmatprep.mubr.bf16.mxu0 0
    %338 = vmatmul.mubr.bf16.gmra.mxu0 %v112
    %v339 = vpop.f32.mrf.mxu0
    %v340 = vadd.f32 0.0, %v339
    %v341 = vpop.f32.mrf.mxu0
    %v342 = vadd.f32 0.0, %v341
    %v343 = vpop.f32.mrf.mxu0
    %v344 = vpop.f32.mrf.mxu0
    %345 = vdwg.mxu0
    %346 = vmatprep.subr.bf16.mxu0 %v272
    %347 = vmatpush1.bf16.msra.mxu0 %v271
    %348 = vmatprep.subr.bf16.mxu0 %v268
    %349 = vmatpush1.bf16.msra.mxu0 %v267
    %350 = vmatprep.subr.bf16.mxu0 %v264
    %351 = vmatpush1.bf16.msra.mxu0 %v263
    %352 = vmatprep.subr.bf16.mxu0 %v260
    %353 = vmatpush1.bf16.msra.mxu0 %v259
    %354 = vmatprep.subr.bf16.mxu0 %v256
    %355 = vmatpush1.bf16.msra.mxu0 %v255
    %356 = vmatprep.subr.bf16.mxu0 %v252
    %357 = vmatpush1.bf16.msra.mxu0 %v251
    %358 = vmatprep.subr.bf16.mxu0 %v248
    %359 = vmatpush1.bf16.msra.mxu0 %v247
    %360 = vmatprep.subr.bf16.mxu0 %v244
    %361 = vmatpush1.bf16.msra.mxu0 %v243
    %362 = vmatprep.subr.bf16.mxu0 0
    %363 = vmatpush2.bf16.msra.mxu0 0
    %364 = vmatprep.subr.bf16.mxu0 0
    %365 = vmatpush2.bf16.msra.mxu0 0
    %366 = vmatprep.subr.bf16.mxu0 0
    %367 = vmatpush2.bf16.msra.mxu0 0
    %368 = vmatprep.subr.bf16.mxu0 0
    %369 = vmatpush2.bf16.msra.mxu0 0
    %370 = vmatprep.subr.bf16.mxu0 0
    %371 = vmatpush2.bf16.msra.mxu0 0
    %372 = vmatprep.subr.bf16.mxu0 0
    %373 = vmatpush2.bf16.msra.mxu0 0
    %374 = vmatprep.subr.bf16.mxu0 0
    %375 = vmatpush2.bf16.msra.mxu0 0
    %376 = vmatprep.subr.bf16.mxu0 0
    %377 = vmatpush2.bf16.msra.mxu0 0
    %378 = vmatprep.mubr.bf16.mxu0 0
    %379 = vmatmul.mubr.bf16.gmra.mxu0 %v112
    %v380 = vpop.f32.mrf.mxu0
    %v381 = vadd.f32 0.0, %v380
    %v382 = vpop.f32.mrf.mxu0
    %v383 = vadd.f32 0.0, %v382
    %v384 = vpop.f32.mrf.mxu0
    %v385 = vpop.f32.mrf.mxu0
    %386 = vdwg.mxu0
    %v387 = vld [vmem:[#allocation4] sm:$0xf]
    %v389 = vlaneseq
    %v390 = vshrl.u32 %v389, 7
    %v391 = vsub.s32 0, %v390
    %v392 = vrot.slane %v387, %v391
    %v393 = vlaneseq
    %v394 = vshrl.u32 %v393, 7
    %v395 = vsub.s32 1, %v394
    %v396 = vrot.slane %v387, %v395
    %v397 = vlaneseq
    %v398 = vshrl.u32 %v397, 7
    %v399 = vsub.s32 2, %v398
    %v400 = vrot.slane %v387, %v399
    %v401 = vlaneseq
    %v402 = vshrl.u32 %v401, 7
    %v403 = vsub.s32 3, %v402
    %v404 = vrot.slane %v387, %v403
    %v409 = vmul.f32 %v340, %v392
    %v410 = vmul.f32 %v342, %v396
    %v411 = vmul.f32 %v381, %v400
    %v412 = vmul.f32 %v383, %v404
    %v413 = vld [vmem:[#allocation6] sm:$0xf]
    %v415 = vlaneseq
    %v416 = vshrl.u32 %v415, 7
    %v417 = vsub.s32 0, %v416
    %v418 = vrot.slane %v413, %v417
    %v419 = vlaneseq
    %v420 = vshrl.u32 %v419, 7
    %v421 = vsub.s32 1, %v420
    %v422 = vrot.slane %v413, %v421
    %v423 = vlaneseq
    %v424 = vshrl.u32 %v423, 7
    %v425 = vsub.s32 2, %v424
    %v426 = vrot.slane %v413, %v425
    %v427 = vlaneseq
    %v428 = vshrl.u32 %v427, 7
    %v429 = vsub.s32 3, %v428
    %v430 = vrot.slane %v413, %v429
    %v435 = vadd.f32 %v409, %v418
    %v436 = vadd.f32 %v410, %v422
    %v437 = vadd.f32 %v411, %v426
    %v438 = vadd.f32 %v412, %v430
    %v439 = vmax.f32 %v435, 0.0
    %v440 = vmax.f32 %v436, 0.0
    %v441 = vmax.f32 %v437, 0.0
    %v442 = vmax.f32 %v438, 0.0
    %v443 = vand.u32 2147483647, %v435
    %v444 = vand.u32 2147483647, %v436
    %v445 = vand.u32 2147483647, %v437
    %v446 = vand.u32 2147483647, %v438
    %v447 = vsub.f32 0.0, %v443
    %v448 = vsub.f32 0.0, %v444
    %v449 = vsub.f32 0.0, %v445
    %v450 = vsub.f32 0.0, %v446
    %v451 = vmul.f32 %v447, 1.442695
    %v452 = vpow.pop %v451
    %v453 = vmul.f32 %v448, 1.442695
    %v454 = vpow.pop %v453
    %v455 = vmul.f32 %v449, 1.442695
    %v456 = vpow.pop %v455
    %v457 = vmul.f32 %v450, 1.442695
    %v458 = vpow.pop %v457
    %v459 = vadd.f32 %v452, 1.0
    %v460 = vlog2.pop %v459
    %v461 = vmul.f32 %v460, 0.6931472
    %v462 = vmul.f32 -0.5, %v452
    %v463 = vadd.f32 %v462, 1.0
    %v464 = vmul.f32 %v463, %v452
    %v465 = vand.u32 2147483647, %v452
    %vm466 = vcmp.lt.f32.partialorder %v465, 0.0004427343
    %v467 = vsel %vm466, %v464, %v461
    %v468 = vadd.f32 %v454, 1.0
    %v469 = vlog2.pop %v468
    %v470 = vmul.f32 %v469, 0.6931472
    %v471 = vmul.f32 -0.5, %v454
    %v472 = vadd.f32 %v471, 1.0
    %v473 = vmul.f32 %v472, %v454
    %v474 = vand.u32 2147483647, %v454
    %vm475 = vcmp.lt.f32.partialorder %v474, 0.0004427343
    %v476 = vsel %vm475, %v473, %v470
    %v477 = vadd.f32 %v456, 1.0
    %v478 = vlog2.pop %v477
    %v479 = vmul.f32 %v478, 0.6931472
    %v480 = vmul.f32 -0.5, %v456
    %v481 = vadd.f32 %v480, 1.0
    %v482 = vmul.f32 %v481, %v456
    %v483 = vand.u32 2147483647, %v456
    %vm484 = vcmp.lt.f32.partialorder %v483, 0.0004427343
    %v485 = vsel %vm484, %v482, %v479
    %v486 = vadd.f32 %v458, 1.0
    %v487 = vlog2.pop %v486
    %v488 = vmul.f32 %v487, 0.6931472
    %v489 = vmul.f32 -0.5, %v458
    %v490 = vadd.f32 %v489, 1.0
    %v491 = vmul.f32 %v490, %v458
    %v492 = vand.u32 2147483647, %v458
    %vm493 = vcmp.lt.f32.partialorder %v492, 0.0004427343
    %v494 = vsel %vm493, %v491, %v488
    %v495 = vadd.f32 %v439, %v467
    %v496 = vadd.f32 %v440, %v476
    %v497 = vadd.f32 %v441, %v485
    %v498 = vadd.f32 %v442, %v494
    %v499 = vpack.c.bf16 %v495, %v495
    %v500 = vpack.c.bf16 %v496, %v496
    %v501 = vpack.c.bf16 %v497, %v497
    %v502 = vpack.c.bf16 %v498, %v498
    %v503 = vld [vmem:[#allocation7] sm:$0xff]
    %v504 = vld [vmem:[#allocation7 + $0x8] sm:$0xff]
    %v505 = vld [vmem:[#allocation7 + $0x10] sm:$0xff]
    %v506 = vld [vmem:[#allocation7 + $0x18] sm:$0xff]
    %v507 = vld [vmem:[#allocation7 + $0x20] sm:$0xff]
    %v508 = vld [vmem:[#allocation7 + $0x28] sm:$0xff]
    %v509 = vld [vmem:[#allocation7 + $0x30] sm:$0xff]
    %v510 = vld [vmem:[#allocation7 + $0x38] sm:$0xff]
    %v511 = vld [vmem:[#allocation7 + $0x40] sm:$0xff]
    %v512 = vld [vmem:[#allocation7 + $0x48] sm:$0xff]
    %v513 = vld [vmem:[#allocation7 + $0x50] sm:$0xff]
    %v514 = vld [vmem:[#allocation7 + $0x58] sm:$0xff]
    %v515 = vld [vmem:[#allocation7 + $0x60] sm:$0xff]
    %v516 = vld [vmem:[#allocation7 + $0x68] sm:$0xff]
    %v517 = vld [vmem:[#allocation7 + $0x70] sm:$0xff]
    %v518 = vld [vmem:[#allocation7 + $0x78] sm:$0xff]
    %v519 = vld [vmem:[#allocation7 + $0x80] sm:$0xff]
    %v520 = vld [vmem:[#allocation7 + $0x88] sm:$0xff]
    %v521 = vld [vmem:[#allocation7 + $0x90] sm:$0xff]
    %v522 = vld [vmem:[#allocation7 + $0x98] sm:$0xff]
    %v523 = vld [vmem:[#allocation7 + $0xa0] sm:$0xff]
    %v524 = vld [vmem:[#allocation7 + $0xa8] sm:$0xff]
    %v525 = vld [vmem:[#allocation7 + $0xb0] sm:$0xff]
    %v526 = vld [vmem:[#allocation7 + $0xb8] sm:$0xff]
    %v527 = vld [vmem:[#allocation7 + $0xc0] sm:$0xff]
    %v528 = vld [vmem:[#allocation7 + $0xc8] sm:$0xff]
    %v529 = vld [vmem:[#allocation7 + $0xd0] sm:$0xff]
    %v530 = vld [vmem:[#allocation7 + $0xd8] sm:$0xff]
    %v531 = vld [vmem:[#allocation7 + $0xe0] sm:$0xff]
    %v532 = vld [vmem:[#allocation7 + $0xe8] sm:$0xff]
    %v533 = vld [vmem:[#allocation7 + $0xf0] sm:$0xff]
    %v534 = vld [vmem:[#allocation7 + $0xf8] sm:$0xff]
    %v535 = vld [vmem:[#allocation7 + $0x100] sm:$0xff]
    %v536 = vld [vmem:[#allocation7 + $0x108] sm:$0xff]
    %v537 = vld [vmem:[#allocation7 + $0x110] sm:$0xff]
    %v538 = vld [vmem:[#allocation7 + $0x118] sm:$0xff]
    %v539 = vld [vmem:[#allocation7 + $0x120] sm:$0xff]
    %v540 = vld [vmem:[#allocation7 + $0x128] sm:$0xff]
    %v541 = vld [vmem:[#allocation7 + $0x130] sm:$0xff]
    %v542 = vld [vmem:[#allocation7 + $0x138] sm:$0xff]
    %v543 = vld [vmem:[#allocation7 + $0x140] sm:$0xff]
    %v544 = vld [vmem:[#allocation7 + $0x148] sm:$0xff]
    %v545 = vld [vmem:[#allocation7 + $0x150] sm:$0xff]
    %v546 = vld [vmem:[#allocation7 + $0x158] sm:$0xff]
    %v547 = vld [vmem:[#allocation7 + $0x160] sm:$0xff]
    %v548 = vld [vmem:[#allocation7 + $0x168] sm:$0xff]
    %v549 = vld [vmem:[#allocation7 + $0x170] sm:$0xff]
    %v550 = vld [vmem:[#allocation7 + $0x178] sm:$0xff]
    %v551 = vld [vmem:[#allocation7 + $0x180] sm:$0xff]
    %v552 = vld [vmem:[#allocation7 + $0x188] sm:$0xff]
    %v553 = vld [vmem:[#allocation7 + $0x190] sm:$0xff]
    %v554 = vld [vmem:[#allocation7 + $0x198] sm:$0xff]
    %v555 = vld [vmem:[#allocation7 + $0x1a0] sm:$0xff]
    %v556 = vld [vmem:[#allocation7 + $0x1a8] sm:$0xff]
    %v557 = vld [vmem:[#allocation7 + $0x1b0] sm:$0xff]
    %v558 = vld [vmem:[#allocation7 + $0x1b8] sm:$0xff]
    %v559 = vld [vmem:[#allocation7 + $0x1c0] sm:$0xff]
    %v560 = vld [vmem:[#allocation7 + $0x1c8] sm:$0xff]
    %v561 = vld [vmem:[#allocation7 + $0x1d0] sm:$0xff]
    %v562 = vld [vmem:[#allocation7 + $0x1d8] sm:$0xff]
    %v563 = vld [vmem:[#allocation7 + $0x1e0] sm:$0xff]
    %v564 = vld [vmem:[#allocation7 + $0x1e8] sm:$0xff]
    %v565 = vld [vmem:[#allocation7 + $0x1f0] sm:$0xff]
    %v566 = vld [vmem:[#allocation7 + $0x1f8] sm:$0xff]
    %v567 = vld [vmem:[#allocation7 + $0x200] sm:$0xff]
    %v568 = vld [vmem:[#allocation7 + $0x208] sm:$0xff]
    %v569 = vld [vmem:[#allocation7 + $0x210] sm:$0xff]
    %v570 = vld [vmem:[#allocation7 + $0x218] sm:$0xff]
    %v571 = vld [vmem:[#allocation7 + $0x220] sm:$0xff]
    %v572 = vld [vmem:[#allocation7 + $0x228] sm:$0xff]
    %v573 = vld [vmem:[#allocation7 + $0x230] sm:$0xff]
    %v574 = vld [vmem:[#allocation7 + $0x238] sm:$0xff]
    %v575 = vld [vmem:[#allocation7 + $0x240] sm:$0xff]
    %v576 = vld [vmem:[#allocation7 + $0x248] sm:$0xff]
    %v577 = vld [vmem:[#allocation7 + $0x250] sm:$0xff]
    %v578 = vld [vmem:[#allocation7 + $0x258] sm:$0xff]
    %v579 = vld [vmem:[#allocation7 + $0x260] sm:$0xff]
    %v580 = vld [vmem:[#allocation7 + $0x268] sm:$0xff]
    %v581 = vld [vmem:[#allocation7 + $0x270] sm:$0xff]
    %v582 = vld [vmem:[#allocation7 + $0x278] sm:$0xff]
    %v583 = vld [vmem:[#allocation7 + $0x280] sm:$0xff]
    %v584 = vld [vmem:[#allocation7 + $0x288] sm:$0xff]
    %v585 = vld [vmem:[#allocation7 + $0x290] sm:$0xff]
    %v586 = vld [vmem:[#allocation7 + $0x298] sm:$0xff]
    %v587 = vld [vmem:[#allocation7 + $0x2a0] sm:$0xff]
    %v588 = vld [vmem:[#allocation7 + $0x2a8] sm:$0xff]
    %v589 = vld [vmem:[#allocation7 + $0x2b0] sm:$0xff]
    %v590 = vld [vmem:[#allocation7 + $0x2b8] sm:$0xff]
    %v591 = vld [vmem:[#allocation7 + $0x2c0] sm:$0xff]
    %v592 = vld [vmem:[#allocation7 + $0x2c8] sm:$0xff]
    %v593 = vld [vmem:[#allocation7 + $0x2d0] sm:$0xff]
    %v594 = vld [vmem:[#allocation7 + $0x2d8] sm:$0xff]
    %v595 = vld [vmem:[#allocation7 + $0x2e0] sm:$0xff]
    %v596 = vld [vmem:[#allocation7 + $0x2e8] sm:$0xff]
    %v597 = vld [vmem:[#allocation7 + $0x2f0] sm:$0xff]
    %v598 = vld [vmem:[#allocation7 + $0x2f8] sm:$0xff]
    %v599 = vld [vmem:[#allocation7 + $0x300] sm:$0xff]
    %v600 = vld [vmem:[#allocation7 + $0x308] sm:$0xff]
    %v601 = vld [vmem:[#allocation7 + $0x310] sm:$0xff]
    %v602 = vld [vmem:[#allocation7 + $0x318] sm:$0xff]
    %v603 = vld [vmem:[#allocation7 + $0x320] sm:$0xff]
    %v604 = vld [vmem:[#allocation7 + $0x328] sm:$0xff]
    %v605 = vld [vmem:[#allocation7 + $0x330] sm:$0xff]
    %v606 = vld [vmem:[#allocation7 + $0x338] sm:$0xff]
    %v607 = vld [vmem:[#allocation7 + $0x340] sm:$0xff]
    %v608 = vld [vmem:[#allocation7 + $0x348] sm:$0xff]
    %v609 = vld [vmem:[#allocation7 + $0x350] sm:$0xff]
    %v610 = vld [vmem:[#allocation7 + $0x358] sm:$0xff]
    %v611 = vld [vmem:[#allocation7 + $0x360] sm:$0xff]
    %v612 = vld [vmem:[#allocation7 + $0x368] sm:$0xff]
    %v613 = vld [vmem:[#allocation7 + $0x370] sm:$0xff]
    %v614 = vld [vmem:[#allocation7 + $0x378] sm:$0xff]
    %v615 = vld [vmem:[#allocation7 + $0x380] sm:$0xff]
    %v616 = vld [vmem:[#allocation7 + $0x388] sm:$0xff]
    %v617 = vld [vmem:[#allocation7 + $0x390] sm:$0xff]
    %v618 = vld [vmem:[#allocation7 + $0x398] sm:$0xff]
    %v619 = vld [vmem:[#allocation7 + $0x3a0] sm:$0xff]
    %v620 = vld [vmem:[#allocation7 + $0x3a8] sm:$0xff]
    %v621 = vld [vmem:[#allocation7 + $0x3b0] sm:$0xff]
    %v622 = vld [vmem:[#allocation7 + $0x3b8] sm:$0xff]
    %v623 = vld [vmem:[#allocation7 + $0x3c0] sm:$0xff]
    %v624 = vld [vmem:[#allocation7 + $0x3c8] sm:$0xff]
    %v625 = vld [vmem:[#allocation7 + $0x3d0] sm:$0xff]
    %v626 = vld [vmem:[#allocation7 + $0x3d8] sm:$0xff]
    %v627 = vld [vmem:[#allocation7 + $0x3e0] sm:$0xff]
    %v628 = vld [vmem:[#allocation7 + $0x3e8] sm:$0xff]
    %v629 = vld [vmem:[#allocation7 + $0x3f0] sm:$0xff]
    %v630 = vld [vmem:[#allocation7 + $0x3f8] sm:$0xff]
    %v759 = vunpack.c.l.b16 %v503
    %v760 = vunpack.c.h.b16 %v503
    %v761 = vunpack.c.l.b16 %v504
    %v762 = vunpack.c.h.b16 %v504
    %v763 = vunpack.c.l.b16 %v505
    %v764 = vunpack.c.h.b16 %v505
    %v765 = vunpack.c.l.b16 %v506
    %v766 = vunpack.c.h.b16 %v506
    %v767 = vunpack.c.l.b16 %v507
    %v768 = vunpack.c.h.b16 %v507
    %v769 = vunpack.c.l.b16 %v508
    %v770 = vunpack.c.h.b16 %v508
    %v771 = vunpack.c.l.b16 %v509
    %v772 = vunpack.c.h.b16 %v509
    %v773 = vunpack.c.l.b16 %v510
    %v774 = vunpack.c.h.b16 %v510
    %v775 = vunpack.c.l.b16 %v511
    %v776 = vunpack.c.h.b16 %v511
    %v777 = vunpack.c.l.b16 %v512
    %v778 = vunpack.c.h.b16 %v512
    %v779 = vunpack.c.l.b16 %v513
    %v780 = vunpack.c.h.b16 %v513
    %v781 = vunpack.c.l.b16 %v514
    %v782 = vunpack.c.h.b16 %v514
    %v783 = vunpack.c.l.b16 %v515
    %v784 = vunpack.c.h.b16 %v515
    %v785 = vunpack.c.l.b16 %v516
    %v786 = vunpack.c.h.b16 %v516
    %v787 = vunpack.c.l.b16 %v517
    %v788 = vunpack.c.h.b16 %v517
    %v789 = vunpack.c.l.b16 %v518
    %v790 = vunpack.c.h.b16 %v518
    %v791 = vunpack.c.l.b16 %v519
    %v792 = vunpack.c.h.b16 %v519
    %v793 = vunpack.c.l.b16 %v520
    %v794 = vunpack.c.h.b16 %v520
    %v795 = vunpack.c.l.b16 %v521
    %v796 = vunpack.c.h.b16 %v521
    %v797 = vunpack.c.l.b16 %v522
    %v798 = vunpack.c.h.b16 %v522
    %v799 = vunpack.c.l.b16 %v523
    %v800 = vunpack.c.h.b16 %v523
    %v801 = vunpack.c.l.b16 %v524
    %v802 = vunpack.c.h.b16 %v524
    %v803 = vunpack.c.l.b16 %v525
    %v804 = vunpack.c.h.b16 %v525
    %v805 = vunpack.c.l.b16 %v526
    %v806 = vunpack.c.h.b16 %v526
    %v807 = vunpack.c.l.b16 %v527
    %v808 = vunpack.c.h.b16 %v527
    %v809 = vunpack.c.l.b16 %v528
    %v810 = vunpack.c.h.b16 %v528
    %v811 = vunpack.c.l.b16 %v529
    %v812 = vunpack.c.h.b16 %v529
    %v813 = vunpack.c.l.b16 %v530
    %v814 = vunpack.c.h.b16 %v530
    %v815 = vunpack.c.l.b16 %v531
    %v816 = vunpack.c.h.b16 %v531
    %v817 = vunpack.c.l.b16 %v532
    %v818 = vunpack.c.h.b16 %v532
    %v819 = vunpack.c.l.b16 %v533
    %v820 = vunpack.c.h.b16 %v533
    %v821 = vunpack.c.l.b16 %v534
    %v822 = vunpack.c.h.b16 %v534
    %v823 = vunpack.c.l.b16 %v535
    %v824 = vunpack.c.h.b16 %v535
    %v825 = vunpack.c.l.b16 %v536
    %v826 = vunpack.c.h.b16 %v536
    %v827 = vunpack.c.l.b16 %v537
    %v828 = vunpack.c.h.b16 %v537
    %v829 = vunpack.c.l.b16 %v538
    %v830 = vunpack.c.h.b16 %v538
    %v831 = vunpack.c.l.b16 %v539
    %v832 = vunpack.c.h.b16 %v539
    %v833 = vunpack.c.l.b16 %v540
    %v834 = vunpack.c.h.b16 %v540
    %v835 = vunpack.c.l.b16 %v541
    %v836 = vunpack.c.h.b16 %v541
    %v837 = vunpack.c.l.b16 %v542
    %v838 = vunpack.c.h.b16 %v542
    %v839 = vunpack.c.l.b16 %v543
    %v840 = vunpack.c.h.b16 %v543
    %v841 = vunpack.c.l.b16 %v544
    %v842 = vunpack.c.h.b16 %v544
    %v843 = vunpack.c.l.b16 %v545
    %v844 = vunpack.c.h.b16 %v545
    %v845 = vunpack.c.l.b16 %v546
    %v846 = vunpack.c.h.b16 %v546
    %v847 = vunpack.c.l.b16 %v547
    %v848 = vunpack.c.h.b16 %v547
    %v849 = vunpack.c.l.b16 %v548
    %v850 = vunpack.c.h.b16 %v548
    %v851 = vunpack.c.l.b16 %v549
    %v852 = vunpack.c.h.b16 %v549
    %v853 = vunpack.c.l.b16 %v550
    %v854 = vunpack.c.h.b16 %v550
    %v855 = vunpack.c.l.b16 %v551
    %v856 = vunpack.c.h.b16 %v551
    %v857 = vunpack.c.l.b16 %v552
    %v858 = vunpack.c.h.b16 %v552
    %v859 = vunpack.c.l.b16 %v553
    %v860 = vunpack.c.h.b16 %v553
    %v861 = vunpack.c.l.b16 %v554
    %v862 = vunpack.c.h.b16 %v554
    %v863 = vunpack.c.l.b16 %v555
    %v864 = vunpack.c.h.b16 %v555
    %v865 = vunpack.c.l.b16 %v556
    %v866 = vunpack.c.h.b16 %v556
    %v867 = vunpack.c.l.b16 %v557
    %v868 = vunpack.c.h.b16 %v557
    %v869 = vunpack.c.l.b16 %v558
    %v870 = vunpack.c.h.b16 %v558
    %v871 = vunpack.c.l.b16 %v559
    %v872 = vunpack.c.h.b16 %v559
    %v873 = vunpack.c.l.b16 %v560
    %v874 = vunpack.c.h.b16 %v560
    %v875 = vunpack.c.l.b16 %v561
    %v876 = vunpack.c.h.b16 %v561
    %v877 = vunpack.c.l.b16 %v562
    %v878 = vunpack.c.h.b16 %v562
    %v879 = vunpack.c.l.b16 %v563
    %v880 = vunpack.c.h.b16 %v563
    %v881 = vunpack.c.l.b16 %v564
    %v882 = vunpack.c.h.b16 %v564
    %v883 = vunpack.c.l.b16 %v565
    %v884 = vunpack.c.h.b16 %v565
    %v885 = vunpack.c.l.b16 %v566
    %v886 = vunpack.c.h.b16 %v566
    %v887 = vunpack.c.l.b16 %v567
    %v888 = vunpack.c.h.b16 %v567
    %v889 = vunpack.c.l.b16 %v568
    %v890 = vunpack.c.h.b16 %v568
    %v891 = vunpack.c.l.b16 %v569
    %v892 = vunpack.c.h.b16 %v569
    %v893 = vunpack.c.l.b16 %v570
    %v894 = vunpack.c.h.b16 %v570
    %v895 = vunpack.c.l.b16 %v571
    %v896 = vunpack.c.h.b16 %v571
    %v897 = vunpack.c.l.b16 %v572
    %v898 = vunpack.c.h.b16 %v572
    %v899 = vunpack.c.l.b16 %v573
    %v900 = vunpack.c.h.b16 %v573
    %v901 = vunpack.c.l.b16 %v574
    %v902 = vunpack.c.h.b16 %v574
    %v903 = vunpack.c.l.b16 %v575
    %v904 = vunpack.c.h.b16 %v575
    %v905 = vunpack.c.l.b16 %v576
    %v906 = vunpack.c.h.b16 %v576
    %v907 = vunpack.c.l.b16 %v577
    %v908 = vunpack.c.h.b16 %v577
    %v909 = vunpack.c.l.b16 %v578
    %v910 = vunpack.c.h.b16 %v578
    %v911 = vunpack.c.l.b16 %v579
    %v912 = vunpack.c.h.b16 %v579
    %v913 = vunpack.c.l.b16 %v580
    %v914 = vunpack.c.h.b16 %v580
    %v915 = vunpack.c.l.b16 %v581
    %v916 = vunpack.c.h.b16 %v581
    %v917 = vunpack.c.l.b16 %v582
    %v918 = vunpack.c.h.b16 %v582
    %v919 = vunpack.c.l.b16 %v583
    %v920 = vunpack.c.h.b16 %v583
    %v921 = vunpack.c.l.b16 %v584
    %v922 = vunpack.c.h.b16 %v584
    %v923 = vunpack.c.l.b16 %v585
    %v924 = vunpack.c.h.b16 %v585
    %v925 = vunpack.c.l.b16 %v586
    %v926 = vunpack.c.h.b16 %v586
    %v927 = vunpack.c.l.b16 %v587
    %v928 = vunpack.c.h.b16 %v587
    %v929 = vunpack.c.l.b16 %v588
    %v930 = vunpack.c.h.b16 %v588
    %v931 = vunpack.c.l.b16 %v589
    %v932 = vunpack.c.h.b16 %v589
    %v933 = vunpack.c.l.b16 %v590
    %v934 = vunpack.c.h.b16 %v590
    %v935 = vunpack.c.l.b16 %v591
    %v936 = vunpack.c.h.b16 %v591
    %v937 = vunpack.c.l.b16 %v592
    %v938 = vunpack.c.h.b16 %v592
    %v939 = vunpack.c.l.b16 %v593
    %v940 = vunpack.c.h.b16 %v593
    %v941 = vunpack.c.l.b16 %v594
    %v942 = vunpack.c.h.b16 %v594
    %v943 = vunpack.c.l.b16 %v595
    %v944 = vunpack.c.h.b16 %v595
    %v945 = vunpack.c.l.b16 %v596
    %v946 = vunpack.c.h.b16 %v596
    %v947 = vunpack.c.l.b16 %v597
    %v948 = vunpack.c.h.b16 %v597
    %v949 = vunpack.c.l.b16 %v598
    %v950 = vunpack.c.h.b16 %v598
    %v951 = vunpack.c.l.b16 %v599
    %v952 = vunpack.c.h.b16 %v599
    %v953 = vunpack.c.l.b16 %v600
    %v954 = vunpack.c.h.b16 %v600
    %v955 = vunpack.c.l.b16 %v601
    %v956 = vunpack.c.h.b16 %v601
    %v957 = vunpack.c.l.b16 %v602
    %v958 = vunpack.c.h.b16 %v602
    %v959 = vunpack.c.l.b16 %v603
    %v960 = vunpack.c.h.b16 %v603
    %v961 = vunpack.c.l.b16 %v604
    %v962 = vunpack.c.h.b16 %v604
    %v963 = vunpack.c.l.b16 %v605
    %v964 = vunpack.c.h.b16 %v605
    %v965 = vunpack.c.l.b16 %v606
    %v966 = vunpack.c.h.b16 %v606
    %v967 = vunpack.c.l.b16 %v607
    %v968 = vunpack.c.h.b16 %v607
    %v969 = vunpack.c.l.b16 %v608
    %v970 = vunpack.c.h.b16 %v608
    %v971 = vunpack.c.l.b16 %v609
    %v972 = vunpack.c.h.b16 %v609
    %v973 = vunpack.c.l.b16 %v610
    %v974 = vunpack.c.h.b16 %v610
    %v975 = vunpack.c.l.b16 %v611
    %v976 = vunpack.c.h.b16 %v611
    %v977 = vunpack.c.l.b16 %v612
    %v978 = vunpack.c.h.b16 %v612
    %v979 = vunpack.c.l.b16 %v613
    %v980 = vunpack.c.h.b16 %v613
    %v981 = vunpack.c.l.b16 %v614
    %v982 = vunpack.c.h.b16 %v614
    %v983 = vunpack.c.l.b16 %v615
    %v984 = vunpack.c.h.b16 %v615
    %v985 = vunpack.c.l.b16 %v616
    %v986 = vunpack.c.h.b16 %v616
    %v987 = vunpack.c.l.b16 %v617
    %v988 = vunpack.c.h.b16 %v617
    %v989 = vunpack.c.l.b16 %v618
    %v990 = vunpack.c.h.b16 %v618
    %v991 = vunpack.c.l.b16 %v619
    %v992 = vunpack.c.h.b16 %v619
    %v993 = vunpack.c.l.b16 %v620
    %v994 = vunpack.c.h.b16 %v620
    %v995 = vunpack.c.l.b16 %v621
    %v996 = vunpack.c.h.b16 %v621
    %v997 = vunpack.c.l.b16 %v622
    %v998 = vunpack.c.h.b16 %v622
    %v999 = vunpack.c.l.b16 %v623
    %v1000 = vunpack.c.h.b16 %v623
    %v1001 = vunpack.c.l.b16 %v624
    %v1002 = vunpack.c.h.b16 %v624
    %v1003 = vunpack.c.l.b16 %v625
    %v1004 = vunpack.c.h.b16 %v625
    %v1005 = vunpack.c.l.b16 %v626
    %v1006 = vunpack.c.h.b16 %v626
    %v1007 = vunpack.c.l.b16 %v627
    %v1008 = vunpack.c.h.b16 %v627
    %v1009 = vunpack.c.l.b16 %v628
    %v1010 = vunpack.c.h.b16 %v628
    %v1011 = vunpack.c.l.b16 %v629
    %v1012 = vunpack.c.h.b16 %v629
    %v1013 = vunpack.c.l.b16 %v630
    %v1014 = vunpack.c.h.b16 %v630
    %v1015 = vpack.c.b16 %v763, %v759
    %v1016 = vpack.c.b16 %v764, %v760
    %v1017 = vpack.c.b16 %v765, %v761
    %v1018 = vpack.c.b16 %v766, %v762
    %v1019 = vpack.c.b16 %v771, %v767
    %v1020 = vpack.c.b16 %v772, %v768
    %v1021 = vpack.c.b16 %v773, %v769
    %v1022 = vpack.c.b16 %v774, %v770
    %v1023 = vpack.c.b16 %v779, %v775
    %v1024 = vpack.c.b16 %v780, %v776
    %v1025 = vpack.c.b16 %v781, %v777
    %v1026 = vpack.c.b16 %v782, %v778
    %v1027 = vpack.c.b16 %v787, %v783
    %v1028 = vpack.c.b16 %v788, %v784
    %v1029 = vpack.c.b16 %v789, %v785
    %v1030 = vpack.c.b16 %v790, %v786
    %v1031 = vpack.c.b16 %v795, %v791
    %v1032 = vpack.c.b16 %v796, %v792
    %v1033 = vpack.c.b16 %v797, %v793
    %v1034 = vpack.c.b16 %v798, %v794
    %v1035 = vpack.c.b16 %v803, %v799
    %v1036 = vpack.c.b16 %v804, %v800
    %v1037 = vpack.c.b16 %v805, %v801
    %v1038 = vpack.c.b16 %v806, %v802
    %v1039 = vpack.c.b16 %v811, %v807
    %v1040 = vpack.c.b16 %v812, %v808
    %v1041 = vpack.c.b16 %v813, %v809
    %v1042 = vpack.c.b16 %v814, %v810
    %v1043 = vpack.c.b16 %v819, %v815
    %v1044 = vpack.c.b16 %v820, %v816
    %v1045 = vpack.c.b16 %v821, %v817
    %v1046 = vpack.c.b16 %v822, %v818
    %v1047 = vpack.c.b16 %v827, %v823
    %v1048 = vpack.c.b16 %v828, %v824
    %v1049 = vpack.c.b16 %v829, %v825
    %v1050 = vpack.c.b16 %v830, %v826
    %v1051 = vpack.c.b16 %v835, %v831
    %v1052 = vpack.c.b16 %v836, %v832
    %v1053 = vpack.c.b16 %v837, %v833
    %v1054 = vpack.c.b16 %v838, %v834
    %v1055 = vpack.c.b16 %v843, %v839
    %v1056 = vpack.c.b16 %v844, %v840
    %v1057 = vpack.c.b16 %v845, %v841
    %v1058 = vpack.c.b16 %v846, %v842
    %v1059 = vpack.c.b16 %v851, %v847
    %v1060 = vpack.c.b16 %v852, %v848
    %v1061 = vpack.c.b16 %v853, %v849
    %v1062 = vpack.c.b16 %v854, %v850
    %v1063 = vpack.c.b16 %v859, %v855
    %v1064 = vpack.c.b16 %v860, %v856
    %v1065 = vpack.c.b16 %v861, %v857
    %v1066 = vpack.c.b16 %v862, %v858
    %v1067 = vpack.c.b16 %v867, %v863
    %v1068 = vpack.c.b16 %v868, %v864
    %v1069 = vpack.c.b16 %v869, %v865
    %v1070 = vpack.c.b16 %v870, %v866
    %v1071 = vpack.c.b16 %v875, %v871
    %v1072 = vpack.c.b16 %v876, %v872
    %v1073 = vpack.c.b16 %v877, %v873
    %v1074 = vpack.c.b16 %v878, %v874
    %v1075 = vpack.c.b16 %v883, %v879
    %v1076 = vpack.c.b16 %v884, %v880
    %v1077 = vpack.c.b16 %v885, %v881
    %v1078 = vpack.c.b16 %v886, %v882
    %v1079 = vpack.c.b16 %v891, %v887
    %v1080 = vpack.c.b16 %v892, %v888
    %v1081 = vpack.c.b16 %v893, %v889
    %v1082 = vpack.c.b16 %v894, %v890
    %v1083 = vpack.c.b16 %v899, %v895
    %v1084 = vpack.c.b16 %v900, %v896
    %v1085 = vpack.c.b16 %v901, %v897
    %v1086 = vpack.c.b16 %v902, %v898
    %v1087 = vpack.c.b16 %v907, %v903
    %v1088 = vpack.c.b16 %v908, %v904
    %v1089 = vpack.c.b16 %v909, %v905
    %v1090 = vpack.c.b16 %v910, %v906
    %v1091 = vpack.c.b16 %v915, %v911
    %v1092 = vpack.c.b16 %v916, %v912
    %v1093 = vpack.c.b16 %v917, %v913
    %v1094 = vpack.c.b16 %v918, %v914
    %v1095 = vpack.c.b16 %v923, %v919
    %v1096 = vpack.c.b16 %v924, %v920
    %v1097 = vpack.c.b16 %v925, %v921
    %v1098 = vpack.c.b16 %v926, %v922
    %v1099 = vpack.c.b16 %v931, %v927
    %v1100 = vpack.c.b16 %v932, %v928
    %v1101 = vpack.c.b16 %v933, %v929
    %v1102 = vpack.c.b16 %v934, %v930
    %v1103 = vpack.c.b16 %v939, %v935
    %v1104 = vpack.c.b16 %v940, %v936
    %v1105 = vpack.c.b16 %v941, %v937
    %v1106 = vpack.c.b16 %v942, %v938
    %v1107 = vpack.c.b16 %v947, %v943
    %v1108 = vpack.c.b16 %v948, %v944
    %v1109 = vpack.c.b16 %v949, %v945
    %v1110 = vpack.c.b16 %v950, %v946
    %v1111 = vpack.c.b16 %v955, %v951
    %v1112 = vpack.c.b16 %v956, %v952
    %v1113 = vpack.c.b16 %v957, %v953
    %v1114 = vpack.c.b16 %v958, %v954
    %v1115 = vpack.c.b16 %v963, %v959
    %v1116 = vpack.c.b16 %v964, %v960
    %v1117 = vpack.c.b16 %v965, %v961
    %v1118 = vpack.c.b16 %v966, %v962
    %v1119 = vpack.c.b16 %v971, %v967
    %v1120 = vpack.c.b16 %v972, %v968
    %v1121 = vpack.c.b16 %v973, %v969
    %v1122 = vpack.c.b16 %v974, %v970
    %v1123 = vpack.c.b16 %v979, %v975
    %v1124 = vpack.c.b16 %v980, %v976
    %v1125 = vpack.c.b16 %v981, %v977
    %v1126 = vpack.c.b16 %v982, %v978
    %v1127 = vpack.c.b16 %v987, %v983
    %v1128 = vpack.c.b16 %v988, %v984
    %v1129 = vpack.c.b16 %v989, %v985
    %v1130 = vpack.c.b16 %v990, %v986
    %v1131 = vpack.c.b16 %v995, %v991
    %v1132 = vpack.c.b16 %v996, %v992
    %v1133 = vpack.c.b16 %v997, %v993
    %v1134 = vpack.c.b16 %v998, %v994
    %v1135 = vpack.c.b16 %v1003, %v999
    %v1136 = vpack.c.b16 %v1004, %v1000
    %v1137 = vpack.c.b16 %v1005, %v1001
    %v1138 = vpack.c.b16 %v1006, %v1002
    %v1139 = vpack.c.b16 %v1011, %v1007
    %v1140 = vpack.c.b16 %v1012, %v1008
    %v1141 = vpack.c.b16 %v1013, %v1009
    %v1142 = vpack.c.b16 %v1014, %v1010
    %1271 = vmatprep.subr.bf16.mxu0 %v1044
    %1272 = vmatpush1.bf16.msra.mxu0 %v1043
    %1273 = vmatprep.subr.bf16.mxu0 %v1040
    %1274 = vmatpush1.bf16.msra.mxu0 %v1039
    %1275 = vmatprep.subr.bf16.mxu0 %v1036
    %1276 = vmatpush1.bf16.msra.mxu0 %v1035
    %1277 = vmatprep.subr.bf16.mxu0 %v1032
    %1278 = vmatpush1.bf16.msra.mxu0 %v1031
    %1279 = vmatprep.subr.bf16.mxu0 %v1028
    %1280 = vmatpush1.bf16.msra.mxu0 %v1027
    %1281 = vmatprep.subr.bf16.mxu0 %v1024
    %1282 = vmatpush1.bf16.msra.mxu0 %v1023
    %1283 = vmatprep.subr.bf16.mxu0 %v1020
    %1284 = vmatpush1.bf16.msra.mxu0 %v1019
    %1285 = vmatprep.subr.bf16.mxu0 %v1016
    %1286 = vmatpush1.bf16.msra.mxu0 %v1015
    %1287 = vmatprep.subr.bf16.mxu0 %v1076
    %1288 = vmatpush2.bf16.msra.mxu0 %v1075
    %1289 = vmatprep.subr.bf16.mxu0 %v1072
    %1290 = vmatpush2.bf16.msra.mxu0 %v1071
    %1291 = vmatprep.subr.bf16.mxu0 %v1068
    %1292 = vmatpush2.bf16.msra.mxu0 %v1067
    %1293 = vmatprep.subr.bf16.mxu0 %v1064
    %1294 = vmatpush2.bf16.msra.mxu0 %v1063
    %1295 = vmatprep.subr.bf16.mxu0 %v1060
    %1296 = vmatpush2.bf16.msra.mxu0 %v1059
    %1297 = vmatprep.subr.bf16.mxu0 %v1056
    %1298 = vmatpush2.bf16.msra.mxu0 %v1055
    %1299 = vmatprep.subr.bf16.mxu0 %v1052
    %1300 = vmatpush2.bf16.msra.mxu0 %v1051
    %1301 = vmatprep.subr.bf16.mxu0 %v1048
    %1302 = vmatpush2.bf16.msra.mxu0 %v1047
    %1303 = vmatprep.mubr.bf16.mxu0 %v500
    %1304 = vmatmul.mubr.bf16.gmra.mxu0 %v499
    %v1305 = vpop.f32.mrf.mxu0
    %v1306 = vadd.f32 0.0, %v1305
    %v1307 = vpop.f32.mrf.mxu0
    %v1308 = vadd.f32 0.0, %v1307
    %v1309 = vpop.f32.mrf.mxu0
    %v1310 = vpop.f32.mrf.mxu0
    %1311 = vdwg.mxu0
    %1312 = vmatprep.subr.bf16.mxu0 %v1108
    %1313 = vmatpush1.bf16.msra.mxu0 %v1107
    %1314 = vmatprep.subr.bf16.mxu0 %v1104
    %1315 = vmatpush1.bf16.msra.mxu0 %v1103
    %1316 = vmatprep.subr.bf16.mxu0 %v1100
    %1317 = vmatpush1.bf16.msra.mxu0 %v1099
    %1318 = vmatprep.subr.bf16.mxu0 %v1096
    %1319 = vmatpush1.bf16.msra.mxu0 %v1095
    %1320 = vmatprep.subr.bf16.mxu0 %v1092
    %1321 = vmatpush1.bf16.msra.mxu0 %v1091
    %1322 = vmatprep.subr.bf16.mxu0 %v1088
    %1323 = vmatpush1.bf16.msra.mxu0 %v1087
    %1324 = vmatprep.subr.bf16.mxu0 %v1084
    %1325 = vmatpush1.bf16.msra.mxu0 %v1083
    %1326 = vmatprep.subr.bf16.mxu0 %v1080
    %1327 = vmatpush1.bf16.msra.mxu0 %v1079
    %1328 = vmatprep.subr.bf16.mxu0 %v1140
    %1329 = vmatpush2.bf16.msra.mxu0 %v1139
    %1330 = vmatprep.subr.bf16.mxu0 %v1136
    %1331 = vmatpush2.bf16.msra.mxu0 %v1135
    %1332 = vmatprep.subr.bf16.mxu0 %v1132
    %1333 = vmatpush2.bf16.msra.mxu0 %v1131
    %1334 = vmatprep.subr.bf16.mxu0 %v1128
    %1335 = vmatpush2.bf16.msra.mxu0 %v1127
    %1336 = vmatprep.subr.bf16.mxu0 %v1124
    %1337 = vmatpush2.bf16.msra.mxu0 %v1123
    %1338 = vmatprep.subr.bf16.mxu0 %v1120
    %1339 = vmatpush2.bf16.msra.mxu0 %v1119
    %1340 = vmatprep.subr.bf16.mxu0 %v1116
    %1341 = vmatpush2.bf16.msra.mxu0 %v1115
    %1342 = vmatprep.subr.bf16.mxu0 %v1112
    %1343 = vmatpush2.bf16.msra.mxu0 %v1111
    %1344 = vmatprep.mubr.bf16.mxu0 %v502
    %1345 = vmatmul.mubr.bf16.gmra.mxu0 %v501
    %v1346 = vpop.f32.mrf.mxu0
    %v1347 = vadd.f32 %v1306, %v1346
    %v1348 = vpop.f32.mrf.mxu0
    %v1349 = vadd.f32 %v1308, %v1348
    %v1350 = vpop.f32.mrf.mxu0
    %v1351 = vpop.f32.mrf.mxu0
    %1352 = vdwg.mxu0
    %1353 = vmatprep.subr.bf16.mxu0 %v1046
    %1354 = vmatpush1.bf16.msra.mxu0 %v1045
    %1355 = vmatprep.subr.bf16.mxu0 %v1042
    %1356 = vmatpush1.bf16.msra.mxu0 %v1041
    %1357 = vmatprep.subr.bf16.mxu0 %v1038
    %1358 = vmatpush1.bf16.msra.mxu0 %v1037
    %1359 = vmatprep.subr.bf16.mxu0 %v1034
    %1360 = vmatpush1.bf16.msra.mxu0 %v1033
    %1361 = vmatprep.subr.bf16.mxu0 %v1030
    %1362 = vmatpush1.bf16.msra.mxu0 %v1029
    %1363 = vmatprep.subr.bf16.mxu0 %v1026
    %1364 = vmatpush1.bf16.msra.mxu0 %v1025
    %1365 = vmatprep.subr.bf16.mxu0 %v1022
    %1366 = vmatpush1.bf16.msra.mxu0 %v1021
    %1367 = vmatprep.subr.bf16.mxu0 %v1018
    %1368 = vmatpush1.bf16.msra.mxu0 %v1017
    %1369 = vmatprep.subr.bf16.mxu0 %v1078
    %1370 = vmatpush2.bf16.msra.mxu0 %v1077
    %1371 = vmatprep.subr.bf16.mxu0 %v1074
    %1372 = vmatpush2.bf16.msra.mxu0 %v1073
    %1373 = vmatprep.subr.bf16.mxu0 %v1070
    %1374 = vmatpush2.bf16.msra.mxu0 %v1069
    %1375 = vmatprep.subr.bf16.mxu0 %v1066
    %1376 = vmatpush2.bf16.msra.mxu0 %v1065
    %1377 = vmatprep.subr.bf16.mxu0 %v1062
    %1378 = vmatpush2.bf16.msra.mxu0 %v1061
    %1379 = vmatprep.subr.bf16.mxu0 %v1058
    %1380 = vmatpush2.bf16.msra.mxu0 %v1057
    %1381 = vmatprep.subr.bf16.mxu0 %v1054
    %1382 = vmatpush2.bf16.msra.mxu0 %v1053
    %1383 = vmatprep.subr.bf16.mxu0 %v1050
    %1384 = vmatpush2.bf16.msra.mxu0 %v1049
    %1385 = vmatprep.mubr.bf16.mxu0 %v500
    %1386 = vmatmul.mubr.bf16.gmra.mxu0 %v499
    %v1387 = vpop.f32.mrf.mxu0
    %v1388 = vadd.f32 0.0, %v1387
    %v1389 = vpop.f32.mrf.mxu0
    %v1390 = vadd.f32 0.0, %v1389
    %v1391 = vpop.f32.mrf.mxu0
    %v1392 = vpop.f32.mrf.mxu0
    %1393 = vdwg.mxu0
    %1394 = vmatprep.subr.bf16.mxu0 %v1110
    %1395 = vmatpush1.bf16.msra.mxu0 %v1109
    %1396 = vmatprep.subr.bf16.mxu0 %v1106
    %1397 = vmatpush1.bf16.msra.mxu0 %v1105
    %1398 = vmatprep.subr.bf16.mxu0 %v1102
    %1399 = vmatpush1.bf16.msra.mxu0 %v1101
    %1400 = vmatprep.subr.bf16.mxu0 %v1098
    %1401 = vmatpush1.bf16.msra.mxu0 %v1097
    %1402 = vmatprep.subr.bf16.mxu0 %v1094
    %1403 = vmatpush1.bf16.msra.mxu0 %v1093
    %1404 = vmatprep.subr.bf16.mxu0 %v1090
    %1405 = vmatpush1.bf16.msra.mxu0 %v1089
    %1406 = vmatprep.subr.bf16.mxu0 %v1086
    %1407 = vmatpush1.bf16.msra.mxu0 %v1085
    %1408 = vmatprep.subr.bf16.mxu0 %v1082
    %1409 = vmatpush1.bf16.msra.mxu0 %v1081
    %1410 = vmatprep.subr.bf16.mxu0 %v1142
    %1411 = vmatpush2.bf16.msra.mxu0 %v1141
    %1412 = vmatprep.subr.bf16.mxu0 %v1138
    %1413 = vmatpush2.bf16.msra.mxu0 %v1137
    %1414 = vmatprep.subr.bf16.mxu0 %v1134
    %1415 = vmatpush2.bf16.msra.mxu0 %v1133
    %1416 = vmatprep.subr.bf16.mxu0 %v1130
    %1417 = vmatpush2.bf16.msra.mxu0 %v1129
    %1418 = vmatprep.subr.bf16.mxu0 %v1126
    %1419 = vmatpush2.bf16.msra.mxu0 %v1125
    %1420 = vmatprep.subr.bf16.mxu0 %v1122
    %1421 = vmatpush2.bf16.msra.mxu0 %v1121
    %1422 = vmatprep.subr.bf16.mxu0 %v1118
    %1423 = vmatpush2.bf16.msra.mxu0 %v1117
    %1424 = vmatprep.subr.bf16.mxu0 %v1114
    %1425 = vmatpush2.bf16.msra.mxu0 %v1113
    %1426 = vmatprep.mubr.bf16.mxu0 %v502
    %1427 = vmatmul.mubr.bf16.gmra.mxu0 %v501
    %v1428 = vpop.f32.mrf.mxu0
    %v1429 = vadd.f32 %v1388, %v1428
    %v1430 = vpop.f32.mrf.mxu0
    %v1431 = vadd.f32 %v1390, %v1430
    %v1432 = vpop.f32.mrf.mxu0
    %v1433 = vpop.f32.mrf.mxu0
    %1434 = vdwg.mxu0
    %v1435 = vld [vmem:[#allocation9] sm:$0xf]
    %v1437 = vlaneseq
    %v1438 = vshrl.u32 %v1437, 7
    %v1439 = vsub.s32 0, %v1438
    %v1440 = vrot.slane %v1435, %v1439
    %v1441 = vlaneseq
    %v1442 = vshrl.u32 %v1441, 7
    %v1443 = vsub.s32 1, %v1442
    %v1444 = vrot.slane %v1435, %v1443
    %v1445 = vlaneseq
    %v1446 = vshrl.u32 %v1445, 7
    %v1447 = vsub.s32 2, %v1446
    %v1448 = vrot.slane %v1435, %v1447
    %v1449 = vlaneseq
    %v1450 = vshrl.u32 %v1449, 7
    %v1451 = vsub.s32 3, %v1450
    %v1452 = vrot.slane %v1435, %v1451
    %v1457 = vmul.f32 %v1347, %v1440
    %v1458 = vmul.f32 %v1349, %v1444
    %v1459 = vmul.f32 %v1429, %v1448
    %v1460 = vmul.f32 %v1431, %v1452
    %v1461 = vld [vmem:[%s6] sm:$0xf]
    %v1463 = vlaneseq
    %v1464 = vshrl.u32 %v1463, 7
    %v1465 = vsub.s32 0, %v1464
    %v1466 = vrot.slane %v1461, %v1465
    %v1467 = vlaneseq
    %v1468 = vshrl.u32 %v1467, 7
    %v1469 = vsub.s32 1, %v1468
    %v1470 = vrot.slane %v1461, %v1469
    %v1471 = vlaneseq
    %v1472 = vshrl.u32 %v1471, 7
    %v1473 = vsub.s32 2, %v1472
    %v1474 = vrot.slane %v1461, %v1473
    %v1475 = vlaneseq
    %v1476 = vshrl.u32 %v1475, 7
    %v1477 = vsub.s32 3, %v1476
    %v1478 = vrot.slane %v1461, %v1477
    %v1483 = vadd.f32 %v1457, %v1466
    %v1484 = vadd.f32 %v1458, %v1470
    %v1485 = vadd.f32 %v1459, %v1474
    %v1486 = vadd.f32 %v1460, %v1478
    %v1487 = vmax.f32 %v1483, 0.0
    %v1488 = vmax.f32 %v1484, 0.0
    %v1489 = vmax.f32 %v1485, 0.0
    %v1490 = vmax.f32 %v1486, 0.0
    %v1491 = vand.u32 2147483647, %v1483
    %v1492 = vand.u32 2147483647, %v1484
    %v1493 = vand.u32 2147483647, %v1485
    %v1494 = vand.u32 2147483647, %v1486
    %v1495 = vsub.f32 0.0, %v1491
    %v1496 = vsub.f32 0.0, %v1492
    %v1497 = vsub.f32 0.0, %v1493
    %v1498 = vsub.f32 0.0, %v1494
    %v1499 = vmul.f32 %v1495, 1.442695
    %v1500 = vpow.pop %v1499
    %v1501 = vmul.f32 %v1496, 1.442695
    %v1502 = vpow.pop %v1501
    %v1503 = vmul.f32 %v1497, 1.442695
    %v1504 = vpow.pop %v1503
    %v1505 = vmul.f32 %v1498, 1.442695
    %v1506 = vpow.pop %v1505
    %v1507 = vadd.f32 %v1500, 1.0
    %v1508 = vlog2.pop %v1507
    %v1509 = vmul.f32 %v1508, 0.6931472
    %v1510 = vmul.f32 -0.5, %v1500
    %v1511 = vadd.f32 %v1510, 1.0
    %v1512 = vmul.f32 %v1511, %v1500
    %v1513 = vand.u32 2147483647, %v1500
    %vm1514 = vcmp.lt.f32.partialorder %v1513, 0.0004427343
    %v1515 = vsel %vm1514, %v1512, %v1509
    %v1516 = vadd.f32 %v1502, 1.0
    %v1517 = vlog2.pop %v1516
    %v1518 = vmul.f32 %v1517, 0.6931472
    %v1519 = vmul.f32 -0.5, %v1502
    %v1520 = vadd.f32 %v1519, 1.0
    %v1521 = vmul.f32 %v1520, %v1502
    %v1522 = vand.u32 2147483647, %v1502
    %vm1523 = vcmp.lt.f32.partialorder %v1522, 0.0004427343
    %v1524 = vsel %vm1523, %v1521, %v1518
    %v1525 = vadd.f32 %v1504, 1.0
    %v1526 = vlog2.pop %v1525
    %v1527 = vmul.f32 %v1526, 0.6931472
    %v1528 = vmul.f32 -0.5, %v1504
    %v1529 = vadd.f32 %v1528, 1.0
    %v1530 = vmul.f32 %v1529, %v1504
    %v1531 = vand.u32 2147483647, %v1504
    %vm1532 = vcmp.lt.f32.partialorder %v1531, 0.0004427343
    %v1533 = vsel %vm1532, %v1530, %v1527
    %v1534 = vadd.f32 %v1506, 1.0
    %v1535 = vlog2.pop %v1534
    %v1536 = vmul.f32 %v1535, 0.6931472
    %v1537 = vmul.f32 -0.5, %v1506
    %v1538 = vadd.f32 %v1537, 1.0
    %v1539 = vmul.f32 %v1538, %v1506
    %v1540 = vand.u32 2147483647, %v1506
    %vm1541 = vcmp.lt.f32.partialorder %v1540, 0.0004427343
    %v1542 = vsel %vm1541, %v1539, %v1536
    %v1543 = vadd.f32 %v1487, %v1515
    %v1544 = vadd.f32 %v1488, %v1524
    %v1545 = vadd.f32 %v1489, %v1533
    %v1546 = vadd.f32 %v1490, %v1542
    %v1547 = vpack.c.bf16 %v1543, %v1543
    %v1548 = vpack.c.bf16 %v1544, %v1544
    %v1549 = vpack.c.bf16 %v1545, %v1545
    %v1550 = vpack.c.bf16 %v1546, %v1546
    %v1551 = vld [vmem:[#allocation10] sm:$0xff]
    %v1552 = vld [vmem:[#allocation10 + $0x8] sm:$0xff]
    %v1553 = vld [vmem:[#allocation10 + $0x10] sm:$0xff]
    %v1554 = vld [vmem:[#allocation10 + $0x18] sm:$0xf]
    %v1555 = vld [vmem:[#allocation10 + $0x1c] sm:$0xff]
    %v1556 = vld [vmem:[#allocation10 + $0x24] sm:$0xff]
    %v1557 = vld [vmem:[#allocation10 + $0x2c] sm:$0xff]
    %v1558 = vld [vmem:[#allocation10 + $0x34] sm:$0xf]
    %v1559 = vld [vmem:[#allocation10 + $0x38] sm:$0xff]
    %v1560 = vld [vmem:[#allocation10 + $0x40] sm:$0xff]
    %v1561 = vld [vmem:[#allocation10 + $0x48] sm:$0xff]
    %v1562 = vld [vmem:[#allocation10 + $0x50] sm:$0xf]
    %v1563 = vld [vmem:[#allocation10 + $0x54] sm:$0xff]
    %v1564 = vld [vmem:[#allocation10 + $0x5c] sm:$0xff]
    %v1565 = vld [vmem:[#allocation10 + $0x64] sm:$0xff]
    %v1566 = vld [vmem:[#allocation10 + $0x6c] sm:$0xf]
    %v1567 = vld [vmem:[#allocation10 + $0x70] sm:$0xff]
    %v1568 = vld [vmem:[#allocation10 + $0x78] sm:$0xff]
    %v1569 = vld [vmem:[#allocation10 + $0x80] sm:$0xff]
    %v1570 = vld [vmem:[#allocation10 + $0x88] sm:$0xf]
    %v1571 = vld [vmem:[#allocation10 + $0x8c] sm:$0xff]
    %v1572 = vld [vmem:[#allocation10 + $0x94] sm:$0xff]
    %v1573 = vld [vmem:[#allocation10 + $0x9c] sm:$0xff]
    %v1574 = vld [vmem:[#allocation10 + $0xa4] sm:$0xf]
    %v1575 = vld [vmem:[#allocation10 + $0xa8] sm:$0xff]
    %v1576 = vld [vmem:[#allocation10 + $0xb0] sm:$0xff]
    %v1577 = vld [vmem:[#allocation10 + $0xb8] sm:$0xff]
    %v1578 = vld [vmem:[#allocation10 + $0xc0] sm:$0xf]
    %v1579 = vld [vmem:[#allocation10 + $0xc4] sm:$0xff]
    %v1580 = vld [vmem:[#allocation10 + $0xcc] sm:$0xff]
    %v1581 = vld [vmem:[#allocation10 + $0xd4] sm:$0xff]
    %v1582 = vld [vmem:[#allocation10 + $0xdc] sm:$0xf]
    %v1583 = vld [vmem:[#allocation10 + $0xe0] sm:$0xff]
    %v1584 = vld [vmem:[#allocation10 + $0xe8] sm:$0xff]
    %v1585 = vld [vmem:[#allocation10 + $0xf0] sm:$0xff]
    %v1586 = vld [vmem:[#allocation10 + $0xf8] sm:$0xf]
    %v1587 = vld [vmem:[#allocation10 + $0xfc] sm:$0xff]
    %v1588 = vld [vmem:[#allocation10 + $0x104] sm:$0xff]
    %v1589 = vld [vmem:[#allocation10 + $0x10c] sm:$0xff]
    %v1590 = vld [vmem:[#allocation10 + $0x114] sm:$0xf]
    %v1591 = vld [vmem:[#allocation10 + $0x118] sm:$0xff]
    %v1592 = vld [vmem:[#allocation10 + $0x120] sm:$0xff]
    %v1593 = vld [vmem:[#allocation10 + $0x128] sm:$0xff]
    %v1594 = vld [vmem:[#allocation10 + $0x130] sm:$0xf]
    %v1595 = vld [vmem:[#allocation10 + $0x134] sm:$0xff]
    %v1596 = vld [vmem:[#allocation10 + $0x13c] sm:$0xff]
    %v1597 = vld [vmem:[#allocation10 + $0x144] sm:$0xff]
    %v1598 = vld [vmem:[#allocation10 + $0x14c] sm:$0xf]
    %v1599 = vld [vmem:[#allocation10 + $0x150] sm:$0xff]
    %v1600 = vld [vmem:[#allocation10 + $0x158] sm:$0xff]
    %v1601 = vld [vmem:[#allocation10 + $0x160] sm:$0xff]
    %v1602 = vld [vmem:[#allocation10 + $0x168] sm:$0xf]
    %v1603 = vld [vmem:[#allocation10 + $0x16c] sm:$0xff]
    %v1604 = vld [vmem:[#allocation10 + $0x174] sm:$0xff]
    %v1605 = vld [vmem:[#allocation10 + $0x17c] sm:$0xff]
    %v1606 = vld [vmem:[#allocation10 + $0x184] sm:$0xf]
    %v1607 = vld [vmem:[#allocation10 + $0x188] sm:$0xff]
    %v1608 = vld [vmem:[#allocation10 + $0x190] sm:$0xff]
    %v1609 = vld [vmem:[#allocation10 + $0x198] sm:$0xff]
    %v1610 = vld [vmem:[#allocation10 + $0x1a0] sm:$0xf]
    %v1611 = vld [vmem:[#allocation10 + $0x1a4] sm:$0xff]
    %v1612 = vld [vmem:[#allocation10 + $0x1ac] sm:$0xff]
    %v1613 = vld [vmem:[#allocation10 + $0x1b4] sm:$0xff]
    %v1614 = vld [vmem:[#allocation10 + $0x1bc] sm:$0xf]
    %v1615 = vld [vmem:[#allocation10 + $0x1c0] sm:$0xff]
    %v1616 = vld [vmem:[#allocation10 + $0x1c8] sm:$0xff]
    %v1617 = vld [vmem:[#allocation10 + $0x1d0] sm:$0xff]
    %v1618 = vld [vmem:[#allocation10 + $0x1d8] sm:$0xf]
    %v1619 = vld [vmem:[#allocation10 + $0x1dc] sm:$0xff]
    %v1620 = vld [vmem:[#allocation10 + $0x1e4] sm:$0xff]
    %v1621 = vld [vmem:[#allocation10 + $0x1ec] sm:$0xff]
    %v1622 = vld [vmem:[#allocation10 + $0x1f4] sm:$0xf]
    %v1623 = vld [vmem:[#allocation10 + $0x1f8] sm:$0xff]
    %v1624 = vld [vmem:[#allocation10 + $0x200] sm:$0xff]
    %v1625 = vld [vmem:[#allocation10 + $0x208] sm:$0xff]
    %v1626 = vld [vmem:[#allocation10 + $0x210] sm:$0xf]
    %v1627 = vld [vmem:[#allocation10 + $0x214] sm:$0xff]
    %v1628 = vld [vmem:[#allocation10 + $0x21c] sm:$0xff]
    %v1629 = vld [vmem:[#allocation10 + $0x224] sm:$0xff]
    %v1630 = vld [vmem:[#allocation10 + $0x22c] sm:$0xf]
    %v1631 = vld [vmem:[#allocation10 + $0x230] sm:$0xff]
    %v1632 = vld [vmem:[#allocation10 + $0x238] sm:$0xff]
    %v1633 = vld [vmem:[#allocation10 + $0x240] sm:$0xff]
    %v1634 = vld [vmem:[#allocation10 + $0x248] sm:$0xf]
    %v1635 = vld [vmem:[#allocation10 + $0x24c] sm:$0xff]
    %v1636 = vld [vmem:[#allocation10 + $0x254] sm:$0xff]
    %v1637 = vld [vmem:[#allocation10 + $0x25c] sm:$0xff]
    %v1638 = vld [vmem:[#allocation10 + $0x264] sm:$0xf]
    %v1639 = vld [vmem:[#allocation10 + $0x268] sm:$0xff]
    %v1640 = vld [vmem:[#allocation10 + $0x270] sm:$0xff]
    %v1641 = vld [vmem:[#allocation10 + $0x278] sm:$0xff]
    %v1642 = vld [vmem:[#allocation10 + $0x280] sm:$0xf]
    %v1643 = vld [vmem:[#allocation10 + $0x284] sm:$0xff]
    %v1644 = vld [vmem:[#allocation10 + $0x28c] sm:$0xff]
    %v1645 = vld [vmem:[#allocation10 + $0x294] sm:$0xff]
    %v1646 = vld [vmem:[#allocation10 + $0x29c] sm:$0xf]
    %v1647 = vld [vmem:[#allocation10 + $0x2a0] sm:$0xff]
    %v1648 = vld [vmem:[#allocation10 + $0x2a8] sm:$0xff]
    %v1649 = vld [vmem:[#allocation10 + $0x2b0] sm:$0xff]
    %v1650 = vld [vmem:[#allocation10 + $0x2b8] sm:$0xf]
    %v1651 = vld [vmem:[#allocation10 + $0x2bc] sm:$0xff]
    %v1652 = vld [vmem:[#allocation10 + $0x2c4] sm:$0xff]
    %v1653 = vld [vmem:[#allocation10 + $0x2cc] sm:$0xff]
    %v1654 = vld [vmem:[#allocation10 + $0x2d4] sm:$0xf]
    %v1655 = vld [vmem:[#allocation10 + $0x2d8] sm:$0xff]
    %v1656 = vld [vmem:[#allocation10 + $0x2e0] sm:$0xff]
    %v1657 = vld [vmem:[#allocation10 + $0x2e8] sm:$0xff]
    %v1658 = vld [vmem:[#allocation10 + $0x2f0] sm:$0xf]
    %v1659 = vld [vmem:[#allocation10 + $0x2f4] sm:$0xff]
    %v1660 = vld [vmem:[#allocation10 + $0x2fc] sm:$0xff]
    %v1661 = vld [vmem:[#allocation10 + $0x304] sm:$0xff]
    %v1662 = vld [vmem:[#allocation10 + $0x30c] sm:$0xf]
    %v1663 = vld [vmem:[#allocation10 + $0x310] sm:$0xff]
    %v1664 = vld [vmem:[#allocation10 + $0x318] sm:$0xff]
    %v1665 = vld [vmem:[#allocation10 + $0x320] sm:$0xff]
    %v1666 = vld [vmem:[#allocation10 + $0x328] sm:$0xf]
    %v1667 = vld [vmem:[#allocation10 + $0x32c] sm:$0xff]
    %v1668 = vld [vmem:[#allocation10 + $0x334] sm:$0xff]
    %v1669 = vld [vmem:[#allocation10 + $0x33c] sm:$0xff]
    %v1670 = vld [vmem:[#allocation10 + $0x344] sm:$0xf]
    %v1671 = vld [vmem:[#allocation10 + $0x348] sm:$0xff]
    %v1672 = vld [vmem:[#allocation10 + $0x350] sm:$0xff]
    %v1673 = vld [vmem:[#allocation10 + $0x358] sm:$0xff]
    %v1674 = vld [vmem:[#allocation10 + $0x360] sm:$0xf]
    %v1675 = vld [vmem:[#allocation10 + $0x364] sm:$0xff]
    %v1676 = vld [vmem:[#allocation10 + $0x36c] sm:$0xff]
    %v1677 = vld [vmem:[#allocation10 + $0x374] sm:$0xff]
    %v1678 = vld [vmem:[#allocation10 + $0x37c] sm:$0xf]
    %v1679 = vld [vmem:[#allocation10 + $0x380] sm:$0xff]
    %v1680 = vld [vmem:[#allocation10 + $0x388] sm:$0xff]
    %v1681 = vld [vmem:[#allocation10 + $0x390] sm:$0xff]
    %v1682 = vld [vmem:[#allocation10 + $0x398] sm:$0xf]
    %v1683 = vld [vmem:[#allocation10 + $0x39c] sm:$0xff]
    %v1684 = vld [vmem:[#allocation10 + $0x3a4] sm:$0xff]
    %v1685 = vld [vmem:[#allocation10 + $0x3ac] sm:$0xff]
    %v1686 = vld [vmem:[#allocation10 + $0x3b4] sm:$0xf]
    %v1687 = vld [vmem:[#allocation10 + $0x3b8] sm:$0xff]
    %v1688 = vld [vmem:[#allocation10 + $0x3c0] sm:$0xff]
    %v1689 = vld [vmem:[#allocation10 + $0x3c8] sm:$0xff]
    %v1690 = vld [vmem:[#allocation10 + $0x3d0] sm:$0xf]
    %v1691 = vld [vmem:[#allocation10 + $0x3d4] sm:$0xff]
    %v1692 = vld [vmem:[#allocation10 + $0x3dc] sm:$0xff]
    %v1693 = vld [vmem:[#allocation10 + $0x3e4] sm:$0xff]
    %v1694 = vld [vmem:[#allocation10 + $0x3ec] sm:$0xf]
    %v1695 = vld [vmem:[#allocation10 + $0x3f0] sm:$0xff]
    %v1696 = vld [vmem:[#allocation10 + $0x3f8] sm:$0xff]
    %v1697 = vld [vmem:[#allocation10 + $0x400] sm:$0xff]
    %v1698 = vld [vmem:[#allocation10 + $0x408] sm:$0xf]
    %v1699 = vld [vmem:[#allocation10 + $0x40c] sm:$0xff]
    %v1700 = vld [vmem:[#allocation10 + $0x414] sm:$0xff]
    %v1701 = vld [vmem:[#allocation10 + $0x41c] sm:$0xff]
    %v1702 = vld [vmem:[#allocation10 + $0x424] sm:$0xf]
    %v1703 = vld [vmem:[#allocation10 + $0x428] sm:$0xff]
    %v1704 = vld [vmem:[#allocation10 + $0x430] sm:$0xff]
    %v1705 = vld [vmem:[#allocation10 + $0x438] sm:$0xff]
    %v1706 = vld [vmem:[#allocation10 + $0x440] sm:$0xf]
    %v1707 = vld [vmem:[#allocation10 + $0x444] sm:$0xff]
    %v1708 = vld [vmem:[#allocation10 + $0x44c] sm:$0xff]
    %v1709 = vld [vmem:[#allocation10 + $0x454] sm:$0xff]
    %v1710 = vld [vmem:[#allocation10 + $0x45c] sm:$0xf]
    %v1711 = vld [vmem:[#allocation10 + $0x460] sm:$0xff]
    %v1712 = vld [vmem:[#allocation10 + $0x468] sm:$0xff]
    %v1713 = vld [vmem:[#allocation10 + $0x470] sm:$0xff]
    %v1714 = vld [vmem:[#allocation10 + $0x478] sm:$0xf]
    %v1715 = vld [vmem:[#allocation10 + $0x47c] sm:$0xff]
    %v1716 = vld [vmem:[#allocation10 + $0x484] sm:$0xff]
    %v1717 = vld [vmem:[#allocation10 + $0x48c] sm:$0xff]
    %v1718 = vld [vmem:[#allocation10 + $0x494] sm:$0xf]
    %v1719 = vld [vmem:[#allocation10 + $0x498] sm:$0xff]
    %v1720 = vld [vmem:[#allocation10 + $0x4a0] sm:$0xff]
    %v1721 = vld [vmem:[#allocation10 + $0x4a8] sm:$0xff]
    %v1722 = vld [vmem:[#allocation10 + $0x4b0] sm:$0xf]
    %v1723 = vld [vmem:[#allocation10 + $0x4b4] sm:$0xff]
    %v1724 = vld [vmem:[#allocation10 + $0x4bc] sm:$0xff]
    %v1725 = vld [vmem:[#allocation10 + $0x4c4] sm:$0xff]
    %v1726 = vld [vmem:[#allocation10 + $0x4cc] sm:$0xf]
    %v1727 = vld [vmem:[#allocation10 + $0x4d0] sm:$0xff]
    %v1728 = vld [vmem:[#allocation10 + $0x4d8] sm:$0xff]
    %v1729 = vld [vmem:[#allocation10 + $0x4e0] sm:$0xff]
    %v1730 = vld [vmem:[#allocation10 + $0x4e8] sm:$0xf]
    %v1731 = vld [vmem:[#allocation10 + $0x4ec] sm:$0xff]
    %v1732 = vld [vmem:[#allocation10 + $0x4f4] sm:$0xff]
    %v1733 = vld [vmem:[#allocation10 + $0x4fc] sm:$0xff]
    %v1734 = vld [vmem:[#allocation10 + $0x504] sm:$0xf]
    %v1735 = vld [vmem:[#allocation10 + $0x508] sm:$0xff]
    %v1736 = vld [vmem:[#allocation10 + $0x510] sm:$0xff]
    %v1737 = vld [vmem:[#allocation10 + $0x518] sm:$0xff]
    %v1738 = vld [vmem:[#allocation10 + $0x520] sm:$0xf]
    %v1739 = vld [vmem:[#allocation10 + $0x524] sm:$0xff]
    %v1740 = vld [vmem:[#allocation10 + $0x52c] sm:$0xff]
    %v1741 = vld [vmem:[#allocation10 + $0x534] sm:$0xff]
    %v1742 = vld [vmem:[#allocation10 + $0x53c] sm:$0xf]
    %v1743 = vld [vmem:[#allocation10 + $0x540] sm:$0xff]
    %v1744 = vld [vmem:[#allocation10 + $0x548] sm:$0xff]
    %v1745 = vld [vmem:[#allocation10 + $0x550] sm:$0xff]
    %v1746 = vld [vmem:[#allocation10 + $0x558] sm:$0xf]
    %v1747 = vld [vmem:[#allocation10 + $0x55c] sm:$0xff]
    %v1748 = vld [vmem:[#allocation10 + $0x564] sm:$0xff]
    %v1749 = vld [vmem:[#allocation10 + $0x56c] sm:$0xff]
    %v1750 = vld [vmem:[#allocation10 + $0x574] sm:$0xf]
    %v1751 = vld [vmem:[#allocation10 + $0x578] sm:$0xff]
    %v1752 = vld [vmem:[#allocation10 + $0x580] sm:$0xff]
    %v1753 = vld [vmem:[#allocation10 + $0x588] sm:$0xff]
    %v1754 = vld [vmem:[#allocation10 + $0x590] sm:$0xf]
    %v1755 = vld [vmem:[#allocation10 + $0x594] sm:$0xff]
    %v1756 = vld [vmem:[#allocation10 + $0x59c] sm:$0xff]
    %v1757 = vld [vmem:[#allocation10 + $0x5a4] sm:$0xff]
    %v1758 = vld [vmem:[#allocation10 + $0x5ac] sm:$0xf]
    %v1759 = vld [vmem:[#allocation10 + $0x5b0] sm:$0xff]
    %v1760 = vld [vmem:[#allocation10 + $0x5b8] sm:$0xff]
    %v1761 = vld [vmem:[#allocation10 + $0x5c0] sm:$0xff]
    %v1762 = vld [vmem:[#allocation10 + $0x5c8] sm:$0xf]
    %v1763 = vld [vmem:[#allocation10 + $0x5cc] sm:$0xff]
    %v1764 = vld [vmem:[#allocation10 + $0x5d4] sm:$0xff]
    %v1765 = vld [vmem:[#allocation10 + $0x5dc] sm:$0xff]
    %v1766 = vld [vmem:[#allocation10 + $0x5e4] sm:$0xf]
    %v1767 = vld [vmem:[#allocation10 + $0x5e8] sm:$0xff]
    %v1768 = vld [vmem:[#allocation10 + $0x5f0] sm:$0xff]
    %v1769 = vld [vmem:[#allocation10 + $0x5f8] sm:$0xff]
    %v1770 = vld [vmem:[#allocation10 + $0x600] sm:$0xf]
    %v1771 = vld [vmem:[#allocation10 + $0x604] sm:$0xff]
    %v1772 = vld [vmem:[#allocation10 + $0x60c] sm:$0xff]
    %v1773 = vld [vmem:[#allocation10 + $0x614] sm:$0xff]
    %v1774 = vld [vmem:[#allocation10 + $0x61c] sm:$0xf]
    %v1775 = vld [vmem:[#allocation10 + $0x620] sm:$0xff]
    %v1776 = vld [vmem:[#allocation10 + $0x628] sm:$0xff]
    %v1777 = vld [vmem:[#allocation10 + $0x630] sm:$0xff]
    %v1778 = vld [vmem:[#allocation10 + $0x638] sm:$0xf]
    %v1779 = vld [vmem:[#allocation10 + $0x63c] sm:$0xff]
    %v1780 = vld [vmem:[#allocation10 + $0x644] sm:$0xff]
    %v1781 = vld [vmem:[#allocation10 + $0x64c] sm:$0xff]
    %v1782 = vld [vmem:[#allocation10 + $0x654] sm:$0xf]
    %v1783 = vld [vmem:[#allocation10 + $0x658] sm:$0xff]
    %v1784 = vld [vmem:[#allocation10 + $0x660] sm:$0xff]
    %v1785 = vld [vmem:[#allocation10 + $0x668] sm:$0xff]
    %v1786 = vld [vmem:[#allocation10 + $0x670] sm:$0xf]
    %v1787 = vld [vmem:[#allocation10 + $0x674] sm:$0xff]
    %v1788 = vld [vmem:[#allocation10 + $0x67c] sm:$0xff]
    %v1789 = vld [vmem:[#allocation10 + $0x684] sm:$0xff]
    %v1790 = vld [vmem:[#allocation10 + $0x68c] sm:$0xf]
    %v1791 = vld [vmem:[#allocation10 + $0x690] sm:$0xff]
    %v1792 = vld [vmem:[#allocation10 + $0x698] sm:$0xff]
    %v1793 = vld [vmem:[#allocation10 + $0x6a0] sm:$0xff]
    %v1794 = vld [vmem:[#allocation10 + $0x6a8] sm:$0xf]
    %v1795 = vld [vmem:[#allocation10 + $0x6ac] sm:$0xff]
    %v1796 = vld [vmem:[#allocation10 + $0x6b4] sm:$0xff]
    %v1797 = vld [vmem:[#allocation10 + $0x6bc] sm:$0xff]
    %v1798 = vld [vmem:[#allocation10 + $0x6c4] sm:$0xf]
    %v1799 = vld [vmem:[#allocation10 + $0x6c8] sm:$0xff]
    %v1800 = vld [vmem:[#allocation10 + $0x6d0] sm:$0xff]
    %v1801 = vld [vmem:[#allocation10 + $0x6d8] sm:$0xff]
    %v1802 = vld [vmem:[#allocation10 + $0x6e0] sm:$0xf]
    %v1803 = vld [vmem:[#allocation10 + $0x6e4] sm:$0xff]
    %v1804 = vld [vmem:[#allocation10 + $0x6ec] sm:$0xff]
    %v1805 = vld [vmem:[#allocation10 + $0x6f4] sm:$0xff]
    %v1806 = vld [vmem:[#allocation10 + $0x6fc] sm:$0xf]
    %v2063 = vunpack.c.l.b16 %v1551
    %v2064 = vunpack.c.h.b16 %v1551
    %v2065 = vunpack.c.l.b16 %v1552
    %v2066 = vunpack.c.h.b16 %v1552
    %v2067 = vunpack.c.l.b16 %v1553
    %v2068 = vunpack.c.h.b16 %v1553
    %v2069 = vunpack.c.l.b16 %v1554
    %v2070 = vunpack.c.l.b16 %v1555
    %v2071 = vunpack.c.h.b16 %v1555
    %v2072 = vunpack.c.l.b16 %v1556
    %v2073 = vunpack.c.h.b16 %v1556
    %v2074 = vunpack.c.l.b16 %v1557
    %v2075 = vunpack.c.h.b16 %v1557
    %v2076 = vunpack.c.l.b16 %v1558
    %v2077 = vunpack.c.l.b16 %v1559
    %v2078 = vunpack.c.h.b16 %v1559
    %v2079 = vunpack.c.l.b16 %v1560
    %v2080 = vunpack.c.h.b16 %v1560
    %v2081 = vunpack.c.l.b16 %v1561
    %v2082 = vunpack.c.h.b16 %v1561
    %v2083 = vunpack.c.l.b16 %v1562
    %v2084 = vunpack.c.l.b16 %v1563
    %v2085 = vunpack.c.h.b16 %v1563
    %v2086 = vunpack.c.l.b16 %v1564
    %v2087 = vunpack.c.h.b16 %v1564
    %v2088 = vunpack.c.l.b16 %v1565
    %v2089 = vunpack.c.h.b16 %v1565
    %v2090 = vunpack.c.l.b16 %v1566
    %v2091 = vunpack.c.l.b16 %v1567
    %v2092 = vunpack.c.h.b16 %v1567
    %v2093 = vunpack.c.l.b16 %v1568
    %v2094 = vunpack.c.h.b16 %v1568
    %v2095 = vunpack.c.l.b16 %v1569
    %v2096 = vunpack.c.h.b16 %v1569
    %v2097 = vunpack.c.l.b16 %v1570
    %v2098 = vunpack.c.l.b16 %v1571
    %v2099 = vunpack.c.h.b16 %v1571
    %v2100 = vunpack.c.l.b16 %v1572
    %v2101 = vunpack.c.h.b16 %v1572
    %v2102 = vunpack.c.l.b16 %v1573
    %v2103 = vunpack.c.h.b16 %v1573
    %v2104 = vunpack.c.l.b16 %v1574
    %v2105 = vunpack.c.l.b16 %v1575
    %v2106 = vunpack.c.h.b16 %v1575
    %v2107 = vunpack.c.l.b16 %v1576
    %v2108 = vunpack.c.h.b16 %v1576
    %v2109 = vunpack.c.l.b16 %v1577
    %v2110 = vunpack.c.h.b16 %v1577
    %v2111 = vunpack.c.l.b16 %v1578
    %v2112 = vunpack.c.l.b16 %v1579
    %v2113 = vunpack.c.h.b16 %v1579
    %v2114 = vunpack.c.l.b16 %v1580
    %v2115 = vunpack.c.h.b16 %v1580
    %v2116 = vunpack.c.l.b16 %v1581
    %v2117 = vunpack.c.h.b16 %v1581
    %v2118 = vunpack.c.l.b16 %v1582
    %v2119 = vunpack.c.l.b16 %v1583
    %v2120 = vunpack.c.h.b16 %v1583
    %v2121 = vunpack.c.l.b16 %v1584
    %v2122 = vunpack.c.h.b16 %v1584
    %v2123 = vunpack.c.l.b16 %v1585
    %v2124 = vunpack.c.h.b16 %v1585
    %v2125 = vunpack.c.l.b16 %v1586
    %v2126 = vunpack.c.l.b16 %v1587
    %v2127 = vunpack.c.h.b16 %v1587
    %v2128 = vunpack.c.l.b16 %v1588
    %v2129 = vunpack.c.h.b16 %v1588
    %v2130 = vunpack.c.l.b16 %v1589
    %v2131 = vunpack.c.h.b16 %v1589
    %v2132 = vunpack.c.l.b16 %v1590
    %v2133 = vunpack.c.l.b16 %v1591
    %v2134 = vunpack.c.h.b16 %v1591
    %v2135 = vunpack.c.l.b16 %v1592
    %v2136 = vunpack.c.h.b16 %v1592
    %v2137 = vunpack.c.l.b16 %v1593
    %v2138 = vunpack.c.h.b16 %v1593
    %v2139 = vunpack.c.l.b16 %v1594
    %v2140 = vunpack.c.l.b16 %v1595
    %v2141 = vunpack.c.h.b16 %v1595
    %v2142 = vunpack.c.l.b16 %v1596
    %v2143 = vunpack.c.h.b16 %v1596
    %v2144 = vunpack.c.l.b16 %v1597
    %v2145 = vunpack.c.h.b16 %v1597
    %v2146 = vunpack.c.l.b16 %v1598
    %v2147 = vunpack.c.l.b16 %v1599
    %v2148 = vunpack.c.h.b16 %v1599
    %v2149 = vunpack.c.l.b16 %v1600
    %v2150 = vunpack.c.h.b16 %v1600
    %v2151 = vunpack.c.l.b16 %v1601
    %v2152 = vunpack.c.h.b16 %v1601
    %v2153 = vunpack.c.l.b16 %v1602
    %v2154 = vunpack.c.l.b16 %v1603
    %v2155 = vunpack.c.h.b16 %v1603
    %v2156 = vunpack.c.l.b16 %v1604
    %v2157 = vunpack.c.h.b16 %v1604
    %v2158 = vunpack.c.l.b16 %v1605
    %v2159 = vunpack.c.h.b16 %v1605
    %v2160 = vunpack.c.l.b16 %v1606
    %v2161 = vunpack.c.l.b16 %v1607
    %v2162 = vunpack.c.h.b16 %v1607
    %v2163 = vunpack.c.l.b16 %v1608
    %v2164 = vunpack.c.h.b16 %v1608
    %v2165 = vunpack.c.l.b16 %v1609
    %v2166 = vunpack.c.h.b16 %v1609
    %v2167 = vunpack.c.l.b16 %v1610
    %v2168 = vunpack.c.l.b16 %v1611
    %v2169 = vunpack.c.h.b16 %v1611
    %v2170 = vunpack.c.l.b16 %v1612
    %v2171 = vunpack.c.h.b16 %v1612
    %v2172 = vunpack.c.l.b16 %v1613
    %v2173 = vunpack.c.h.b16 %v1613
    %v2174 = vunpack.c.l.b16 %v1614
    %v2175 = vunpack.c.l.b16 %v1615
    %v2176 = vunpack.c.h.b16 %v1615
    %v2177 = vunpack.c.l.b16 %v1616
    %v2178 = vunpack.c.h.b16 %v1616
    %v2179 = vunpack.c.l.b16 %v1617
    %v2180 = vunpack.c.h.b16 %v1617
    %v2181 = vunpack.c.l.b16 %v1618
    %v2182 = vunpack.c.l.b16 %v1619
    %v2183 = vunpack.c.h.b16 %v1619
    %v2184 = vunpack.c.l.b16 %v1620
    %v2185 = vunpack.c.h.b16 %v1620
    %v2186 = vunpack.c.l.b16 %v1621
    %v2187 = vunpack.c.h.b16 %v1621
    %v2188 = vunpack.c.l.b16 %v1622
    %v2189 = vunpack.c.l.b16 %v1623
    %v2190 = vunpack.c.h.b16 %v1623
    %v2191 = vunpack.c.l.b16 %v1624
    %v2192 = vunpack.c.h.b16 %v1624
    %v2193 = vunpack.c.l.b16 %v1625
    %v2194 = vunpack.c.h.b16 %v1625
    %v2195 = vunpack.c.l.b16 %v1626
    %v2196 = vunpack.c.l.b16 %v1627
    %v2197 = vunpack.c.h.b16 %v1627
    %v2198 = vunpack.c.l.b16 %v1628
    %v2199 = vunpack.c.h.b16 %v1628
    %v2200 = vunpack.c.l.b16 %v1629
    %v2201 = vunpack.c.h.b16 %v1629
    %v2202 = vunpack.c.l.b16 %v1630
    %v2203 = vunpack.c.l.b16 %v1631
    %v2204 = vunpack.c.h.b16 %v1631
    %v2205 = vunpack.c.l.b16 %v1632
    %v2206 = vunpack.c.h.b16 %v1632
    %v2207 = vunpack.c.l.b16 %v1633
    %v2208 = vunpack.c.h.b16 %v1633
    %v2209 = vunpack.c.l.b16 %v1634
    %v2210 = vunpack.c.l.b16 %v1635
    %v2211 = vunpack.c.h.b16 %v1635
    %v2212 = vunpack.c.l.b16 %v1636
    %v2213 = vunpack.c.h.b16 %v1636
    %v2214 = vunpack.c.l.b16 %v1637
    %v2215 = vunpack.c.h.b16 %v1637
    %v2216 = vunpack.c.l.b16 %v1638
    %v2217 = vunpack.c.l.b16 %v1639
    %v2218 = vunpack.c.h.b16 %v1639
    %v2219 = vunpack.c.l.b16 %v1640
    %v2220 = vunpack.c.h.b16 %v1640
    %v2221 = vunpack.c.l.b16 %v1641
    %v2222 = vunpack.c.h.b16 %v1641
    %v2223 = vunpack.c.l.b16 %v1642
    %v2224 = vunpack.c.l.b16 %v1643
    %v2225 = vunpack.c.h.b16 %v1643
    %v2226 = vunpack.c.l.b16 %v1644
    %v2227 = vunpack.c.h.b16 %v1644
    %v2228 = vunpack.c.l.b16 %v1645
    %v2229 = vunpack.c.h.b16 %v1645
    %v2230 = vunpack.c.l.b16 %v1646
    %v2231 = vunpack.c.l.b16 %v1647
    %v2232 = vunpack.c.h.b16 %v1647
    %v2233 = vunpack.c.l.b16 %v1648
    %v2234 = vunpack.c.h.b16 %v1648
    %v2235 = vunpack.c.l.b16 %v1649
    %v2236 = vunpack.c.h.b16 %v1649
    %v2237 = vunpack.c.l.b16 %v1650
    %v2238 = vunpack.c.l.b16 %v1651
    %v2239 = vunpack.c.h.b16 %v1651
    %v2240 = vunpack.c.l.b16 %v1652
    %v2241 = vunpack.c.h.b16 %v1652
    %v2242 = vunpack.c.l.b16 %v1653
    %v2243 = vunpack.c.h.b16 %v1653
    %v2244 = vunpack.c.l.b16 %v1654
    %v2245 = vunpack.c.l.b16 %v1655
    %v2246 = vunpack.c.h.b16 %v1655
    %v2247 = vunpack.c.l.b16 %v1656
    %v2248 = vunpack.c.h.b16 %v1656
    %v2249 = vunpack.c.l.b16 %v1657
    %v2250 = vunpack.c.h.b16 %v1657
    %v2251 = vunpack.c.l.b16 %v1658
    %v2252 = vunpack.c.l.b16 %v1659
    %v2253 = vunpack.c.h.b16 %v1659
    %v2254 = vunpack.c.l.b16 %v1660
    %v2255 = vunpack.c.h.b16 %v1660
    %v2256 = vunpack.c.l.b16 %v1661
    %v2257 = vunpack.c.h.b16 %v1661
    %v2258 = vunpack.c.l.b16 %v1662
    %v2259 = vunpack.c.l.b16 %v1663
    %v2260 = vunpack.c.h.b16 %v1663
    %v2261 = vunpack.c.l.b16 %v1664
    %v2262 = vunpack.c.h.b16 %v1664
    %v2263 = vunpack.c.l.b16 %v1665
    %v2264 = vunpack.c.h.b16 %v1665
    %v2265 = vunpack.c.l.b16 %v1666
    %v2266 = vunpack.c.l.b16 %v1667
    %v2267 = vunpack.c.h.b16 %v1667
    %v2268 = vunpack.c.l.b16 %v1668
    %v2269 = vunpack.c.h.b16 %v1668
    %v2270 = vunpack.c.l.b16 %v1669
    %v2271 = vunpack.c.h.b16 %v1669
    %v2272 = vunpack.c.l.b16 %v1670
    %v2273 = vunpack.c.l.b16 %v1671
    %v2274 = vunpack.c.h.b16 %v1671
    %v2275 = vunpack.c.l.b16 %v1672
    %v2276 = vunpack.c.h.b16 %v1672
    %v2277 = vunpack.c.l.b16 %v1673
    %v2278 = vunpack.c.h.b16 %v1673
    %v2279 = vunpack.c.l.b16 %v1674
    %v2280 = vunpack.c.l.b16 %v1675
    %v2281 = vunpack.c.h.b16 %v1675
    %v2282 = vunpack.c.l.b16 %v1676
    %v2283 = vunpack.c.h.b16 %v1676
    %v2284 = vunpack.c.l.b16 %v1677
    %v2285 = vunpack.c.h.b16 %v1677
    %v2286 = vunpack.c.l.b16 %v1678
    %v2287 = vunpack.c.l.b16 %v1679
    %v2288 = vunpack.c.h.b16 %v1679
    %v2289 = vunpack.c.l.b16 %v1680
    %v2290 = vunpack.c.h.b16 %v1680
    %v2291 = vunpack.c.l.b16 %v1681
    %v2292 = vunpack.c.h.b16 %v1681
    %v2293 = vunpack.c.l.b16 %v1682
    %v2294 = vunpack.c.l.b16 %v1683
    %v2295 = vunpack.c.h.b16 %v1683
    %v2296 = vunpack.c.l.b16 %v1684
    %v2297 = vunpack.c.h.b16 %v1684
    %v2298 = vunpack.c.l.b16 %v1685
    %v2299 = vunpack.c.h.b16 %v1685
    %v2300 = vunpack.c.l.b16 %v1686
    %v2301 = vunpack.c.l.b16 %v1687
    %v2302 = vunpack.c.h.b16 %v1687
    %v2303 = vunpack.c.l.b16 %v1688
    %v2304 = vunpack.c.h.b16 %v1688
    %v2305 = vunpack.c.l.b16 %v1689
    %v2306 = vunpack.c.h.b16 %v1689
    %v2307 = vunpack.c.l.b16 %v1690
    %v2308 = vunpack.c.l.b16 %v1691
    %v2309 = vunpack.c.h.b16 %v1691
    %v2310 = vunpack.c.l.b16 %v1692
    %v2311 = vunpack.c.h.b16 %v1692
    %v2312 = vunpack.c.l.b16 %v1693
    %v2313 = vunpack.c.h.b16 %v1693
    %v2314 = vunpack.c.l.b16 %v1694
    %v2315 = vunpack.c.l.b16 %v1695
    %v2316 = vunpack.c.h.b16 %v1695
    %v2317 = vunpack.c.l.b16 %v1696
    %v2318 = vunpack.c.h.b16 %v1696
    %v2319 = vunpack.c.l.b16 %v1697
    %v2320 = vunpack.c.h.b16 %v1697
    %v2321 = vunpack.c.l.b16 %v1698
    %v2322 = vunpack.c.l.b16 %v1699
    %v2323 = vunpack.c.h.b16 %v1699
    %v2324 = vunpack.c.l.b16 %v1700
    %v2325 = vunpack.c.h.b16 %v1700
    %v2326 = vunpack.c.l.b16 %v1701
    %v2327 = vunpack.c.h.b16 %v1701
    %v2328 = vunpack.c.l.b16 %v1702
    %v2329 = vunpack.c.l.b16 %v1703
    %v2330 = vunpack.c.h.b16 %v1703
    %v2331 = vunpack.c.l.b16 %v1704
    %v2332 = vunpack.c.h.b16 %v1704
    %v2333 = vunpack.c.l.b16 %v1705
    %v2334 = vunpack.c.h.b16 %v1705
    %v2335 = vunpack.c.l.b16 %v1706
    %v2336 = vunpack.c.l.b16 %v1707
    %v2337 = vunpack.c.h.b16 %v1707
    %v2338 = vunpack.c.l.b16 %v1708
    %v2339 = vunpack.c.h.b16 %v1708
    %v2340 = vunpack.c.l.b16 %v1709
    %v2341 = vunpack.c.h.b16 %v1709
    %v2342 = vunpack.c.l.b16 %v1710
    %v2343 = vunpack.c.l.b16 %v1711
    %v2344 = vunpack.c.h.b16 %v1711
    %v2345 = vunpack.c.l.b16 %v1712
    %v2346 = vunpack.c.h.b16 %v1712
    %v2347 = vunpack.c.l.b16 %v1713
    %v2348 = vunpack.c.h.b16 %v1713
    %v2349 = vunpack.c.l.b16 %v1714
    %v2350 = vunpack.c.l.b16 %v1715
    %v2351 = vunpack.c.h.b16 %v1715
    %v2352 = vunpack.c.l.b16 %v1716
    %v2353 = vunpack.c.h.b16 %v1716
    %v2354 = vunpack.c.l.b16 %v1717
    %v2355 = vunpack.c.h.b16 %v1717
    %v2356 = vunpack.c.l.b16 %v1718
    %v2357 = vunpack.c.l.b16 %v1719
    %v2358 = vunpack.c.h.b16 %v1719
    %v2359 = vunpack.c.l.b16 %v1720
    %v2360 = vunpack.c.h.b16 %v1720
    %v2361 = vunpack.c.l.b16 %v1721
    %v2362 = vunpack.c.h.b16 %v1721
    %v2363 = vunpack.c.l.b16 %v1722
    %v2364 = vunpack.c.l.b16 %v1723
    %v2365 = vunpack.c.h.b16 %v1723
    %v2366 = vunpack.c.l.b16 %v1724
    %v2367 = vunpack.c.h.b16 %v1724
    %v2368 = vunpack.c.l.b16 %v1725
    %v2369 = vunpack.c.h.b16 %v1725
    %v2370 = vunpack.c.l.b16 %v1726
    %v2371 = vunpack.c.l.b16 %v1727
    %v2372 = vunpack.c.h.b16 %v1727
    %v2373 = vunpack.c.l.b16 %v1728
    %v2374 = vunpack.c.h.b16 %v1728
    %v2375 = vunpack.c.l.b16 %v1729
    %v2376 = vunpack.c.h.b16 %v1729
    %v2377 = vunpack.c.l.b16 %v1730
    %v2378 = vunpack.c.l.b16 %v1731
    %v2379 = vunpack.c.h.b16 %v1731
    %v2380 = vunpack.c.l.b16 %v1732
    %v2381 = vunpack.c.h.b16 %v1732
    %v2382 = vunpack.c.l.b16 %v1733
    %v2383 = vunpack.c.h.b16 %v1733
    %v2384 = vunpack.c.l.b16 %v1734
    %v2385 = vunpack.c.l.b16 %v1735
    %v2386 = vunpack.c.h.b16 %v1735
    %v2387 = vunpack.c.l.b16 %v1736
    %v2388 = vunpack.c.h.b16 %v1736
    %v2389 = vunpack.c.l.b16 %v1737
    %v2390 = vunpack.c.h.b16 %v1737
    %v2391 = vunpack.c.l.b16 %v1738
    %v2392 = vunpack.c.l.b16 %v1739
    %v2393 = vunpack.c.h.b16 %v1739
    %v2394 = vunpack.c.l.b16 %v1740
    %v2395 = vunpack.c.h.b16 %v1740
    %v2396 = vunpack.c.l.b16 %v1741
    %v2397 = vunpack.c.h.b16 %v1741
    %v2398 = vunpack.c.l.b16 %v1742
    %v2399 = vunpack.c.l.b16 %v1743
    %v2400 = vunpack.c.h.b16 %v1743
    %v2401 = vunpack.c.l.b16 %v1744
    %v2402 = vunpack.c.h.b16 %v1744
    %v2403 = vunpack.c.l.b16 %v1745
    %v2404 = vunpack.c.h.b16 %v1745
    %v2405 = vunpack.c.l.b16 %v1746
    %v2406 = vunpack.c.l.b16 %v1747
    %v2407 = vunpack.c.h.b16 %v1747
    %v2408 = vunpack.c.l.b16 %v1748
    %v2409 = vunpack.c.h.b16 %v1748
    %v2410 = vunpack.c.l.b16 %v1749
    %v2411 = vunpack.c.h.b16 %v1749
    %v2412 = vunpack.c.l.b16 %v1750
    %v2413 = vunpack.c.l.b16 %v1751
    %v2414 = vunpack.c.h.b16 %v1751
    %v2415 = vunpack.c.l.b16 %v1752
    %v2416 = vunpack.c.h.b16 %v1752
    %v2417 = vunpack.c.l.b16 %v1753
    %v2418 = vunpack.c.h.b16 %v1753
    %v2419 = vunpack.c.l.b16 %v1754
    %v2420 = vunpack.c.l.b16 %v1755
    %v2421 = vunpack.c.h.b16 %v1755
    %v2422 = vunpack.c.l.b16 %v1756
    %v2423 = vunpack.c.h.b16 %v1756
    %v2424 = vunpack.c.l.b16 %v1757
    %v2425 = vunpack.c.h.b16 %v1757
    %v2426 = vunpack.c.l.b16 %v1758
    %v2427 = vunpack.c.l.b16 %v1759
    %v2428 = vunpack.c.h.b16 %v1759
    %v2429 = vunpack.c.l.b16 %v1760
    %v2430 = vunpack.c.h.b16 %v1760
    %v2431 = vunpack.c.l.b16 %v1761
    %v2432 = vunpack.c.h.b16 %v1761
    %v2433 = vunpack.c.l.b16 %v1762
    %v2434 = vunpack.c.l.b16 %v1763
    %v2435 = vunpack.c.h.b16 %v1763
    %v2436 = vunpack.c.l.b16 %v1764
    %v2437 = vunpack.c.h.b16 %v1764
    %v2438 = vunpack.c.l.b16 %v1765
    %v2439 = vunpack.c.h.b16 %v1765
    %v2440 = vunpack.c.l.b16 %v1766
    %v2441 = vunpack.c.l.b16 %v1767
    %v2442 = vunpack.c.h.b16 %v1767
    %v2443 = vunpack.c.l.b16 %v1768
    %v2444 = vunpack.c.h.b16 %v1768
    %v2445 = vunpack.c.l.b16 %v1769
    %v2446 = vunpack.c.h.b16 %v1769
    %v2447 = vunpack.c.l.b16 %v1770
    %v2448 = vunpack.c.l.b16 %v1771
    %v2449 = vunpack.c.h.b16 %v1771
    %v2450 = vunpack.c.l.b16 %v1772
    %v2451 = vunpack.c.h.b16 %v1772
    %v2452 = vunpack.c.l.b16 %v1773
    %v2453 = vunpack.c.h.b16 %v1773
    %v2454 = vunpack.c.l.b16 %v1774
    %v2455 = vunpack.c.l.b16 %v1775
    %v2456 = vunpack.c.h.b16 %v1775
    %v2457 = vunpack.c.l.b16 %v1776
    %v2458 = vunpack.c.h.b16 %v1776
    %v2459 = vunpack.c.l.b16 %v1777
    %v2460 = vunpack.c.h.b16 %v1777
    %v2461 = vunpack.c.l.b16 %v1778
    %v2462 = vunpack.c.l.b16 %v1779
    %v2463 = vunpack.c.h.b16 %v1779
    %v2464 = vunpack.c.l.b16 %v1780
    %v2465 = vunpack.c.h.b16 %v1780
    %v2466 = vunpack.c.l.b16 %v1781
    %v2467 = vunpack.c.h.b16 %v1781
    %v2468 = vunpack.c.l.b16 %v1782
    %v2469 = vunpack.c.l.b16 %v1783
    %v2470 = vunpack.c.h.b16 %v1783
    %v2471 = vunpack.c.l.b16 %v1784
    %v2472 = vunpack.c.h.b16 %v1784
    %v2473 = vunpack.c.l.b16 %v1785
    %v2474 = vunpack.c.h.b16 %v1785
    %v2475 = vunpack.c.l.b16 %v1786
    %v2476 = vunpack.c.l.b16 %v1787
    %v2477 = vunpack.c.h.b16 %v1787
    %v2478 = vunpack.c.l.b16 %v1788
    %v2479 = vunpack.c.h.b16 %v1788
    %v2480 = vunpack.c.l.b16 %v1789
    %v2481 = vunpack.c.h.b16 %v1789
    %v2482 = vunpack.c.l.b16 %v1790
    %v2483 = vunpack.c.l.b16 %v1791
    %v2484 = vunpack.c.h.b16 %v1791
    %v2485 = vunpack.c.l.b16 %v1792
    %v2486 = vunpack.c.h.b16 %v1792
    %v2487 = vunpack.c.l.b16 %v1793
    %v2488 = vunpack.c.h.b16 %v1793
    %v2489 = vunpack.c.l.b16 %v1794
    %v2490 = vunpack.c.l.b16 %v1795
    %v2491 = vunpack.c.h.b16 %v1795
    %v2492 = vunpack.c.l.b16 %v1796
    %v2493 = vunpack.c.h.b16 %v1796
    %v2494 = vunpack.c.l.b16 %v1797
    %v2495 = vunpack.c.h.b16 %v1797
    %v2496 = vunpack.c.l.b16 %v1798
    %v2497 = vunpack.c.l.b16 %v1799
    %v2498 = vunpack.c.h.b16 %v1799
    %v2499 = vunpack.c.l.b16 %v1800
    %v2500 = vunpack.c.h.b16 %v1800
    %v2501 = vunpack.c.l.b16 %v1801
    %v2502 = vunpack.c.h.b16 %v1801
    %v2503 = vunpack.c.l.b16 %v1802
    %v2504 = vunpack.c.l.b16 %v1803
    %v2505 = vunpack.c.h.b16 %v1803
    %v2506 = vunpack.c.l.b16 %v1804
    %v2507 = vunpack.c.h.b16 %v1804
    %v2508 = vunpack.c.l.b16 %v1805
    %v2509 = vunpack.c.h.b16 %v1805
    %v2510 = vunpack.c.l.b16 %v1806
    %v2511 = vpack.c.b16 %v2070, %v2063
    %v2512 = vpack.c.b16 %v2071, %v2064
    %v2513 = vpack.c.b16 %v2072, %v2065
    %v2514 = vpack.c.b16 %v2073, %v2066
    %v2515 = vpack.c.b16 %v2074, %v2067
    %v2516 = vpack.c.b16 %v2075, %v2068
    %v2517 = vpack.c.b16 %v2076, %v2069
    %v2518 = vpack.c.b16 %v2084, %v2077
    %v2519 = vpack.c.b16 %v2085, %v2078
    %v2520 = vpack.c.b16 %v2086, %v2079
    %v2521 = vpack.c.b16 %v2087, %v2080
    %v2522 = vpack.c.b16 %v2088, %v2081
    %v2523 = vpack.c.b16 %v2089, %v2082
    %v2524 = vpack.c.b16 %v2090, %v2083
    %v2525 = vpack.c.b16 %v2098, %v2091
    %v2526 = vpack.c.b16 %v2099, %v2092
    %v2527 = vpack.c.b16 %v2100, %v2093
    %v2528 = vpack.c.b16 %v2101, %v2094
    %v2529 = vpack.c.b16 %v2102, %v2095
    %v2530 = vpack.c.b16 %v2103, %v2096
    %v2531 = vpack.c.b16 %v2104, %v2097
    %v2532 = vpack.c.b16 %v2112, %v2105
    %v2533 = vpack.c.b16 %v2113, %v2106
    %v2534 = vpack.c.b16 %v2114, %v2107
    %v2535 = vpack.c.b16 %v2115, %v2108
    %v2536 = vpack.c.b16 %v2116, %v2109
    %v2537 = vpack.c.b16 %v2117, %v2110
    %v2538 = vpack.c.b16 %v2118, %v2111
    %v2539 = vpack.c.b16 %v2126, %v2119
    %v2540 = vpack.c.b16 %v2127, %v2120
    %v2541 = vpack.c.b16 %v2128, %v2121
    %v2542 = vpack.c.b16 %v2129, %v2122
    %v2543 = vpack.c.b16 %v2130, %v2123
    %v2544 = vpack.c.b16 %v2131, %v2124
    %v2545 = vpack.c.b16 %v2132, %v2125
    %v2546 = vpack.c.b16 %v2140, %v2133
    %v2547 = vpack.c.b16 %v2141, %v2134
    %v2548 = vpack.c.b16 %v2142, %v2135
    %v2549 = vpack.c.b16 %v2143, %v2136
    %v2550 = vpack.c.b16 %v2144, %v2137
    %v2551 = vpack.c.b16 %v2145, %v2138
    %v2552 = vpack.c.b16 %v2146, %v2139
    %v2553 = vpack.c.b16 %v2154, %v2147
    %v2554 = vpack.c.b16 %v2155, %v2148
    %v2555 = vpack.c.b16 %v2156, %v2149
    %v2556 = vpack.c.b16 %v2157, %v2150
    %v2557 = vpack.c.b16 %v2158, %v2151
    %v2558 = vpack.c.b16 %v2159, %v2152
    %v2559 = vpack.c.b16 %v2160, %v2153
    %v2560 = vpack.c.b16 %v2168, %v2161
    %v2561 = vpack.c.b16 %v2169, %v2162
    %v2562 = vpack.c.b16 %v2170, %v2163
    %v2563 = vpack.c.b16 %v2171, %v2164
    %v2564 = vpack.c.b16 %v2172, %v2165
    %v2565 = vpack.c.b16 %v2173, %v2166
    %v2566 = vpack.c.b16 %v2174, %v2167
    %v2567 = vpack.c.b16 %v2182, %v2175
    %v2568 = vpack.c.b16 %v2183, %v2176
    %v2569 = vpack.c.b16 %v2184, %v2177
    %v2570 = vpack.c.b16 %v2185, %v2178
    %v2571 = vpack.c.b16 %v2186, %v2179
    %v2572 = vpack.c.b16 %v2187, %v2180
    %v2573 = vpack.c.b16 %v2188, %v2181
    %v2574 = vpack.c.b16 %v2196, %v2189
    %v2575 = vpack.c.b16 %v2197, %v2190
    %v2576 = vpack.c.b16 %v2198, %v2191
    %v2577 = vpack.c.b16 %v2199, %v2192
    %v2578 = vpack.c.b16 %v2200, %v2193
    %v2579 = vpack.c.b16 %v2201, %v2194
    %v2580 = vpack.c.b16 %v2202, %v2195
    %v2581 = vpack.c.b16 %v2210, %v2203
    %v2582 = vpack.c.b16 %v2211, %v2204
    %v2583 = vpack.c.b16 %v2212, %v2205
    %v2584 = vpack.c.b16 %v2213, %v2206
    %v2585 = vpack.c.b16 %v2214, %v2207
    %v2586 = vpack.c.b16 %v2215, %v2208
    %v2587 = vpack.c.b16 %v2216, %v2209
    %v2588 = vpack.c.b16 %v2224, %v2217
    %v2589 = vpack.c.b16 %v2225, %v2218
    %v2590 = vpack.c.b16 %v2226, %v2219
    %v2591 = vpack.c.b16 %v2227, %v2220
    %v2592 = vpack.c.b16 %v2228, %v2221
    %v2593 = vpack.c.b16 %v2229, %v2222
    %v2594 = vpack.c.b16 %v2230, %v2223
    %v2595 = vpack.c.b16 %v2238, %v2231
    %v2596 = vpack.c.b16 %v2239, %v2232
    %v2597 = vpack.c.b16 %v2240, %v2233
    %v2598 = vpack.c.b16 %v2241, %v2234
    %v2599 = vpack.c.b16 %v2242, %v2235
    %v2600 = vpack.c.b16 %v2243, %v2236
    %v2601 = vpack.c.b16 %v2244, %v2237
    %v2602 = vpack.c.b16 %v2252, %v2245
    %v2603 = vpack.c.b16 %v2253, %v2246
    %v2604 = vpack.c.b16 %v2254, %v2247
    %v2605 = vpack.c.b16 %v2255, %v2248
    %v2606 = vpack.c.b16 %v2256, %v2249
    %v2607 = vpack.c.b16 %v2257, %v2250
    %v2608 = vpack.c.b16 %v2258, %v2251
    %v2609 = vpack.c.b16 %v2266, %v2259
    %v2610 = vpack.c.b16 %v2267, %v2260
    %v2611 = vpack.c.b16 %v2268, %v2261
    %v2612 = vpack.c.b16 %v2269, %v2262
    %v2613 = vpack.c.b16 %v2270, %v2263
    %v2614 = vpack.c.b16 %v2271, %v2264
    %v2615 = vpack.c.b16 %v2272, %v2265
    %v2616 = vpack.c.b16 %v2280, %v2273
    %v2617 = vpack.c.b16 %v2281, %v2274
    %v2618 = vpack.c.b16 %v2282, %v2275
    %v2619 = vpack.c.b16 %v2283, %v2276
    %v2620 = vpack.c.b16 %v2284, %v2277
    %v2621 = vpack.c.b16 %v2285, %v2278
    %v2622 = vpack.c.b16 %v2286, %v2279
    %v2623 = vpack.c.b16 %v2294, %v2287
    %v2624 = vpack.c.b16 %v2295, %v2288
    %v2625 = vpack.c.b16 %v2296, %v2289
    %v2626 = vpack.c.b16 %v2297, %v2290
    %v2627 = vpack.c.b16 %v2298, %v2291
    %v2628 = vpack.c.b16 %v2299, %v2292
    %v2629 = vpack.c.b16 %v2300, %v2293
    %v2630 = vpack.c.b16 %v2308, %v2301
    %v2631 = vpack.c.b16 %v2309, %v2302
    %v2632 = vpack.c.b16 %v2310, %v2303
    %v2633 = vpack.c.b16 %v2311, %v2304
    %v2634 = vpack.c.b16 %v2312, %v2305
    %v2635 = vpack.c.b16 %v2313, %v2306
    %v2636 = vpack.c.b16 %v2314, %v2307
    %v2637 = vpack.c.b16 %v2322, %v2315
    %v2638 = vpack.c.b16 %v2323, %v2316
    %v2639 = vpack.c.b16 %v2324, %v2317
    %v2640 = vpack.c.b16 %v2325, %v2318
    %v2641 = vpack.c.b16 %v2326, %v2319
    %v2642 = vpack.c.b16 %v2327, %v2320
    %v2643 = vpack.c.b16 %v2328, %v2321
    %v2644 = vpack.c.b16 %v2336, %v2329
    %v2645 = vpack.c.b16 %v2337, %v2330
    %v2646 = vpack.c.b16 %v2338, %v2331
    %v2647 = vpack.c.b16 %v2339, %v2332
    %v2648 = vpack.c.b16 %v2340, %v2333
    %v2649 = vpack.c.b16 %v2341, %v2334
    %v2650 = vpack.c.b16 %v2342, %v2335
    %v2651 = vpack.c.b16 %v2350, %v2343
    %v2652 = vpack.c.b16 %v2351, %v2344
    %v2653 = vpack.c.b16 %v2352, %v2345
    %v2654 = vpack.c.b16 %v2353, %v2346
    %v2655 = vpack.c.b16 %v2354, %v2347
    %v2656 = vpack.c.b16 %v2355, %v2348
    %v2657 = vpack.c.b16 %v2356, %v2349
    %v2658 = vpack.c.b16 %v2364, %v2357
    %v2659 = vpack.c.b16 %v2365, %v2358
    %v2660 = vpack.c.b16 %v2366, %v2359
    %v2661 = vpack.c.b16 %v2367, %v2360
    %v2662 = vpack.c.b16 %v2368, %v2361
    %v2663 = vpack.c.b16 %v2369, %v2362
    %v2664 = vpack.c.b16 %v2370, %v2363
    %v2665 = vpack.c.b16 %v2378, %v2371
    %v2666 = vpack.c.b16 %v2379, %v2372
    %v2667 = vpack.c.b16 %v2380, %v2373
    %v2668 = vpack.c.b16 %v2381, %v2374
    %v2669 = vpack.c.b16 %v2382, %v2375
    %v2670 = vpack.c.b16 %v2383, %v2376
    %v2671 = vpack.c.b16 %v2384, %v2377
    %v2672 = vpack.c.b16 %v2392, %v2385
    %v2673 = vpack.c.b16 %v2393, %v2386
    %v2674 = vpack.c.b16 %v2394, %v2387
    %v2675 = vpack.c.b16 %v2395, %v2388
    %v2676 = vpack.c.b16 %v2396, %v2389
    %v2677 = vpack.c.b16 %v2397, %v2390
    %v2678 = vpack.c.b16 %v2398, %v2391
    %v2679 = vpack.c.b16 %v2406, %v2399
    %v2680 = vpack.c.b16 %v2407, %v2400
    %v2681 = vpack.c.b16 %v2408, %v2401
    %v2682 = vpack.c.b16 %v2409, %v2402
    %v2683 = vpack.c.b16 %v2410, %v2403
    %v2684 = vpack.c.b16 %v2411, %v2404
    %v2685 = vpack.c.b16 %v2412, %v2405
    %v2686 = vpack.c.b16 %v2420, %v2413
    %v2687 = vpack.c.b16 %v2421, %v2414
    %v2688 = vpack.c.b16 %v2422, %v2415
    %v2689 = vpack.c.b16 %v2423, %v2416
    %v2690 = vpack.c.b16 %v2424, %v2417
    %v2691 = vpack.c.b16 %v2425, %v2418
    %v2692 = vpack.c.b16 %v2426, %v2419
    %v2693 = vpack.c.b16 %v2434, %v2427
    %v2694 = vpack.c.b16 %v2435, %v2428
    %v2695 = vpack.c.b16 %v2436, %v2429
    %v2696 = vpack.c.b16 %v2437, %v2430
    %v2697 = vpack.c.b16 %v2438, %v2431
    %v2698 = vpack.c.b16 %v2439, %v2432
    %v2699 = vpack.c.b16 %v2440, %v2433
    %v2700 = vpack.c.b16 %v2448, %v2441
    %v2701 = vpack.c.b16 %v2449, %v2442
    %v2702 = vpack.c.b16 %v2450, %v2443
    %v2703 = vpack.c.b16 %v2451, %v2444
    %v2704 = vpack.c.b16 %v2452, %v2445
    %v2705 = vpack.c.b16 %v2453, %v2446
    %v2706 = vpack.c.b16 %v2454, %v2447
    %v2707 = vpack.c.b16 %v2462, %v2455
    %v2708 = vpack.c.b16 %v2463, %v2456
    %v2709 = vpack.c.b16 %v2464, %v2457
    %v2710 = vpack.c.b16 %v2465, %v2458
    %v2711 = vpack.c.b16 %v2466, %v2459
    %v2712 = vpack.c.b16 %v2467, %v2460
    %v2713 = vpack.c.b16 %v2468, %v2461
    %v2714 = vpack.c.b16 %v2476, %v2469
    %v2715 = vpack.c.b16 %v2477, %v2470
    %v2716 = vpack.c.b16 %v2478, %v2471
    %v2717 = vpack.c.b16 %v2479, %v2472
    %v2718 = vpack.c.b16 %v2480, %v2473
    %v2719 = vpack.c.b16 %v2481, %v2474
    %v2720 = vpack.c.b16 %v2482, %v2475
    %v2721 = vpack.c.b16 %v2490, %v2483
    %v2722 = vpack.c.b16 %v2491, %v2484
    %v2723 = vpack.c.b16 %v2492, %v2485
    %v2724 = vpack.c.b16 %v2493, %v2486
    %v2725 = vpack.c.b16 %v2494, %v2487
    %v2726 = vpack.c.b16 %v2495, %v2488
    %v2727 = vpack.c.b16 %v2496, %v2489
    %v2728 = vpack.c.b16 %v2504, %v2497
    %v2729 = vpack.c.b16 %v2505, %v2498
    %v2730 = vpack.c.b16 %v2506, %v2499
    %v2731 = vpack.c.b16 %v2507, %v2500
    %v2732 = vpack.c.b16 %v2508, %v2501
    %v2733 = vpack.c.b16 %v2509, %v2502
    %v2734 = vpack.c.b16 %v2510, %v2503
    %2959 = vmatprep.subr.bf16.mxu0 %v2561
    %2960 = vmatpush1.bf16.msra.mxu0 %v2560
    %2961 = vmatprep.subr.bf16.mxu0 %v2554
    %2962 = vmatpush1.bf16.msra.mxu0 %v2553
    %2963 = vmatprep.subr.bf16.mxu0 %v2547
    %2964 = vmatpush1.bf16.msra.mxu0 %v2546
    %2965 = vmatprep.subr.bf16.mxu0 %v2540
    %2966 = vmatpush1.bf16.msra.mxu0 %v2539
    %2967 = vmatprep.subr.bf16.mxu0 %v2533
    %2968 = vmatpush1.bf16.msra.mxu0 %v2532
    %2969 = vmatprep.subr.bf16.mxu0 %v2526
    %2970 = vmatpush1.bf16.msra.mxu0 %v2525
    %2971 = vmatprep.subr.bf16.mxu0 %v2519
    %2972 = vmatpush1.bf16.msra.mxu0 %v2518
    %2973 = vmatprep.subr.bf16.mxu0 %v2512
    %2974 = vmatpush1.bf16.msra.mxu0 %v2511
    %2975 = vmatprep.subr.bf16.mxu0 %v2617
    %2976 = vmatpush2.bf16.msra.mxu0 %v2616
    %2977 = vmatprep.subr.bf16.mxu0 %v2610
    %2978 = vmatpush2.bf16.msra.mxu0 %v2609
    %2979 = vmatprep.subr.bf16.mxu0 %v2603
    %2980 = vmatpush2.bf16.msra.mxu0 %v2602
    %2981 = vmatprep.subr.bf16.mxu0 %v2596
    %2982 = vmatpush2.bf16.msra.mxu0 %v2595
    %2983 = vmatprep.subr.bf16.mxu0 %v2589
    %2984 = vmatpush2.bf16.msra.mxu0 %v2588
    %2985 = vmatprep.subr.bf16.mxu0 %v2582
    %2986 = vmatpush2.bf16.msra.mxu0 %v2581
    %2987 = vmatprep.subr.bf16.mxu0 %v2575
    %2988 = vmatpush2.bf16.msra.mxu0 %v2574
    %2989 = vmatprep.subr.bf16.mxu0 %v2568
    %2990 = vmatpush2.bf16.msra.mxu0 %v2567
    %2991 = vmatprep.mubr.bf16.mxu0 %v1548
    %2992 = vmatmul.mubr.bf16.gmra.mxu0 %v1547
    %v2993 = vpop.f32.mrf.mxu0
    %v2994 = vadd.f32 0.0, %v2993
    %v2995 = vpop.f32.mrf.mxu0
    %v2996 = vadd.f32 0.0, %v2995
    %v2997 = vpop.f32.mrf.mxu0
    %v2998 = vpop.f32.mrf.mxu0
    %2999 = vdwg.mxu0
    %3000 = vmatprep.subr.bf16.mxu0 %v2673
    %3001 = vmatpush1.bf16.msra.mxu0 %v2672
    %3002 = vmatprep.subr.bf16.mxu0 %v2666
    %3003 = vmatpush1.bf16.msra.mxu0 %v2665
    %3004 = vmatprep.subr.bf16.mxu0 %v2659
    %3005 = vmatpush1.bf16.msra.mxu0 %v2658
    %3006 = vmatprep.subr.bf16.mxu0 %v2652
    %3007 = vmatpush1.bf16.msra.mxu0 %v2651
    %3008 = vmatprep.subr.bf16.mxu0 %v2645
    %3009 = vmatpush1.bf16.msra.mxu0 %v2644
    %3010 = vmatprep.subr.bf16.mxu0 %v2638
    %3011 = vmatpush1.bf16.msra.mxu0 %v2637
    %3012 = vmatprep.subr.bf16.mxu0 %v2631
    %3013 = vmatpush1.bf16.msra.mxu0 %v2630
    %3014 = vmatprep.subr.bf16.mxu0 %v2624
    %3015 = vmatpush1.bf16.msra.mxu0 %v2623
    %3016 = vmatprep.subr.bf16.mxu0 %v2729
    %3017 = vmatpush2.bf16.msra.mxu0 %v2728
    %3018 = vmatprep.subr.bf16.mxu0 %v2722
    %3019 = vmatpush2.bf16.msra.mxu0 %v2721
    %3020 = vmatprep.subr.bf16.mxu0 %v2715
    %3021 = vmatpush2.bf16.msra.mxu0 %v2714
    %3022 = vmatprep.subr.bf16.mxu0 %v2708
    %3023 = vmatpush2.bf16.msra.mxu0 %v2707
    %3024 = vmatprep.subr.bf16.mxu0 %v2701
    %3025 = vmatpush2.bf16.msra.mxu0 %v2700
    %3026 = vmatprep.subr.bf16.mxu0 %v2694
    %3027 = vmatpush2.bf16.msra.mxu0 %v2693
    %3028 = vmatprep.subr.bf16.mxu0 %v2687
    %3029 = vmatpush2.bf16.msra.mxu0 %v2686
    %3030 = vmatprep.subr.bf16.mxu0 %v2680
    %3031 = vmatpush2.bf16.msra.mxu0 %v2679
    %3032 = vmatprep.mubr.bf16.mxu0 %v1550
    %3033 = vmatmul.mubr.bf16.gmra.mxu0 %v1549
    %v3034 = vpop.f32.mrf.mxu0
    %v3035 = vadd.f32 %v2994, %v3034
    %v3036 = vpop.f32.mrf.mxu0
    %v3037 = vadd.f32 %v2996, %v3036
    %v3038 = vpop.f32.mrf.mxu0
    %v3039 = vpop.f32.mrf.mxu0
    %3040 = vdwg.mxu0
    %3041 = vmatprep.subr.bf16.mxu0 %v2563
    %3042 = vmatpush1.bf16.msra.mxu0 %v2562
    %3043 = vmatprep.subr.bf16.mxu0 %v2556
    %3044 = vmatpush1.bf16.msra.mxu0 %v2555
    %3045 = vmatprep.subr.bf16.mxu0 %v2549
    %3046 = vmatpush1.bf16.msra.mxu0 %v2548
    %3047 = vmatprep.subr.bf16.mxu0 %v2542
    %3048 = vmatpush1.bf16.msra.mxu0 %v2541
    %3049 = vmatprep.subr.bf16.mxu0 %v2535
    %3050 = vmatpush1.bf16.msra.mxu0 %v2534
    %3051 = vmatprep.subr.bf16.mxu0 %v2528
    %3052 = vmatpush1.bf16.msra.mxu0 %v2527
    %3053 = vmatprep.subr.bf16.mxu0 %v2521
    %3054 = vmatpush1.bf16.msra.mxu0 %v2520
    %3055 = vmatprep.subr.bf16.mxu0 %v2514
    %3056 = vmatpush1.bf16.msra.mxu0 %v2513
    %3057 = vmatprep.subr.bf16.mxu0 %v2619
    %3058 = vmatpush2.bf16.msra.mxu0 %v2618
    %3059 = vmatprep.subr.bf16.mxu0 %v2612
    %3060 = vmatpush2.bf16.msra.mxu0 %v2611
    %3061 = vmatprep.subr.bf16.mxu0 %v2605
    %3062 = vmatpush2.bf16.msra.mxu0 %v2604
    %3063 = vmatprep.subr.bf16.mxu0 %v2598
    %3064 = vmatpush2.bf16.msra.mxu0 %v2597
    %3065 = vmatprep.subr.bf16.mxu0 %v2591
    %3066 = vmatpush2.bf16.msra.mxu0 %v2590
    %3067 = vmatprep.subr.bf16.mxu0 %v2584
    %3068 = vmatpush2.bf16.msra.mxu0 %v2583
    %3069 = vmatprep.subr.bf16.mxu0 %v2577
    %3070 = vmatpush2.bf16.msra.mxu0 %v2576
    %3071 = vmatprep.subr.bf16.mxu0 %v2570
    %3072 = vmatpush2.bf16.msra.mxu0 %v2569
    %3073 = vmatprep.mubr.bf16.mxu0 %v1548
    %3074 = vmatmul.mubr.bf16.gmra.mxu0 %v1547
    %v3075 = vpop.f32.mrf.mxu0
    %v3076 = vadd.f32 0.0, %v3075
    %v3077 = vpop.f32.mrf.mxu0
    %v3078 = vadd.f32 0.0, %v3077
    %v3079 = vpop.f32.mrf.mxu0
    %v3080 = vpop.f32.mrf.mxu0
    %3081 = vdwg.mxu0
    %3082 = vmatprep.subr.bf16.mxu0 %v2675
    %3083 = vmatpush1.bf16.msra.mxu0 %v2674
    %3084 = vmatprep.subr.bf16.mxu0 %v2668
    %3085 = vmatpush1.bf16.msra.mxu0 %v2667
    %3086 = vmatprep.subr.bf16.mxu0 %v2661
    %3087 = vmatpush1.bf16.msra.mxu0 %v2660
    %3088 = vmatprep.subr.bf16.mxu0 %v2654
    %3089 = vmatpush1.bf16.msra.mxu0 %v2653
    %3090 = vmatprep.subr.bf16.mxu0 %v2647
    %3091 = vmatpush1.bf16.msra.mxu0 %v2646
    %3092 = vmatprep.subr.bf16.mxu0 %v2640
    %3093 = vmatpush1.bf16.msra.mxu0 %v2639
    %3094 = vmatprep.subr.bf16.mxu0 %v2633
    %3095 = vmatpush1.bf16.msra.mxu0 %v2632
    %3096 = vmatprep.subr.bf16.mxu0 %v2626
    %3097 = vmatpush1.bf16.msra.mxu0 %v2625
    %3098 = vmatprep.subr.bf16.mxu0 %v2731
    %3099 = vmatpush2.bf16.msra.mxu0 %v2730
    %3100 = vmatprep.subr.bf16.mxu0 %v2724
    %3101 = vmatpush2.bf16.msra.mxu0 %v2723
    %3102 = vmatprep.subr.bf16.mxu0 %v2717
    %3103 = vmatpush2.bf16.msra.mxu0 %v2716
    %3104 = vmatprep.subr.bf16.mxu0 %v2710
    %3105 = vmatpush2.bf16.msra.mxu0 %v2709
    %3106 = vmatprep.subr.bf16.mxu0 %v2703
    %3107 = vmatpush2.bf16.msra.mxu0 %v2702
    %3108 = vmatprep.subr.bf16.mxu0 %v2696
    %3109 = vmatpush2.bf16.msra.mxu0 %v2695
    %3110 = vmatprep.subr.bf16.mxu0 %v2689
    %3111 = vmatpush2.bf16.msra.mxu0 %v2688
    %3112 = vmatprep.subr.bf16.mxu0 %v2682
    %3113 = vmatpush2.bf16.msra.mxu0 %v2681
    %3114 = vmatprep.mubr.bf16.mxu0 %v1550
    %3115 = vmatmul.mubr.bf16.gmra.mxu0 %v1549
    %v3116 = vpop.f32.mrf.mxu0
    %v3117 = vadd.f32 %v3076, %v3116
    %v3118 = vpop.f32.mrf.mxu0
    %v3119 = vadd.f32 %v3078, %v3118
    %v3120 = vpop.f32.mrf.mxu0
    %v3121 = vpop.f32.mrf.mxu0
    %3122 = vdwg.mxu0
    %3123 = vmatprep.subr.bf16.mxu0 %v2565
    %3124 = vmatpush1.bf16.msra.mxu0 %v2564
    %3125 = vmatprep.subr.bf16.mxu0 %v2558
    %3126 = vmatpush1.bf16.msra.mxu0 %v2557
    %3127 = vmatprep.subr.bf16.mxu0 %v2551
    %3128 = vmatpush1.bf16.msra.mxu0 %v2550
    %3129 = vmatprep.subr.bf16.mxu0 %v2544
    %3130 = vmatpush1.bf16.msra.mxu0 %v2543
    %3131 = vmatprep.subr.bf16.mxu0 %v2537
    %3132 = vmatpush1.bf16.msra.mxu0 %v2536
    %3133 = vmatprep.subr.bf16.mxu0 %v2530
    %3134 = vmatpush1.bf16.msra.mxu0 %v2529
    %3135 = vmatprep.subr.bf16.mxu0 %v2523
    %3136 = vmatpush1.bf16.msra.mxu0 %v2522
    %3137 = vmatprep.subr.bf16.mxu0 %v2516
    %3138 = vmatpush1.bf16.msra.mxu0 %v2515
    %3139 = vmatprep.subr.bf16.mxu0 %v2621
    %3140 = vmatpush2.bf16.msra.mxu0 %v2620
    %3141 = vmatprep.subr.bf16.mxu0 %v2614
    %3142 = vmatpush2.bf16.msra.mxu0 %v2613
    %3143 = vmatprep.subr.bf16.mxu0 %v2607
    %3144 = vmatpush2.bf16.msra.mxu0 %v2606
    %3145 = vmatprep.subr.bf16.mxu0 %v2600
    %3146 = vmatpush2.bf16.msra.mxu0 %v2599
    %3147 = vmatprep.subr.bf16.mxu0 %v2593
    %3148 = vmatpush2.bf16.msra.mxu0 %v2592
    %3149 = vmatprep.subr.bf16.mxu0 %v2586
    %3150 = vmatpush2.bf16.msra.mxu0 %v2585
    %3151 = vmatprep.subr.bf16.mxu0 %v2579
    %3152 = vmatpush2.bf16.msra.mxu0 %v2578
    %3153 = vmatprep.subr.bf16.mxu0 %v2572
    %3154 = vmatpush2.bf16.msra.mxu0 %v2571
    %3155 = vmatprep.mubr.bf16.mxu0 %v1548
    %3156 = vmatmul.mubr.bf16.gmra.mxu0 %v1547
    %v3157 = vpop.f32.mrf.mxu0
    %v3158 = vadd.f32 0.0, %v3157
    %v3159 = vpop.f32.mrf.mxu0
    %v3160 = vadd.f32 0.0, %v3159
    %v3161 = vpop.f32.mrf.mxu0
    %v3162 = vpop.f32.mrf.mxu0
    %3163 = vdwg.mxu0
    %3164 = vmatprep.subr.bf16.mxu0 %v2677
    %3165 = vmatpush1.bf16.msra.mxu0 %v2676
    %3166 = vmatprep.subr.bf16.mxu0 %v2670
    %3167 = vmatpush1.bf16.msra.mxu0 %v2669
    %3168 = vmatprep.subr.bf16.mxu0 %v2663
    %3169 = vmatpush1.bf16.msra.mxu0 %v2662
    %3170 = vmatprep.subr.bf16.mxu0 %v2656
    %3171 = vmatpush1.bf16.msra.mxu0 %v2655
    %3172 = vmatprep.subr.bf16.mxu0 %v2649
    %3173 = vmatpush1.bf16.msra.mxu0 %v2648
    %3174 = vmatprep.subr.bf16.mxu0 %v2642
    %3175 = vmatpush1.bf16.msra.mxu0 %v2641
    %3176 = vmatprep.subr.bf16.mxu0 %v2635
    %3177 = vmatpush1.bf16.msra.mxu0 %v2634
    %3178 = vmatprep.subr.bf16.mxu0 %v2628
    %3179 = vmatpush1.bf16.msra.mxu0 %v2627
    %3180 = vmatprep.subr.bf16.mxu0 %v2733
    %3181 = vmatpush2.bf16.msra.mxu0 %v2732
    %3182 = vmatprep.subr.bf16.mxu0 %v2726
    %3183 = vmatpush2.bf16.msra.mxu0 %v2725
    %3184 = vmatprep.subr.bf16.mxu0 %v2719
    %3185 = vmatpush2.bf16.msra.mxu0 %v2718
    %3186 = vmatprep.subr.bf16.mxu0 %v2712
    %3187 = vmatpush2.bf16.msra.mxu0 %v2711
    %3188 = vmatprep.subr.bf16.mxu0 %v2705
    %3189 = vmatpush2.bf16.msra.mxu0 %v2704
    %3190 = vmatprep.subr.bf16.mxu0 %v2698
    %3191 = vmatpush2.bf16.msra.mxu0 %v2697
    %3192 = vmatprep.subr.bf16.mxu0 %v2691
    %3193 = vmatpush2.bf16.msra.mxu0 %v2690
    %3194 = vmatprep.subr.bf16.mxu0 %v2684
    %3195 = vmatpush2.bf16.msra.mxu0 %v2683
    %3196 = vmatprep.mubr.bf16.mxu0 %v1550
    %3197 = vmatmul.mubr.bf16.gmra.mxu0 %v1549
    %v3198 = vpop.f32.mrf.mxu0
    %v3199 = vadd.f32 %v3158, %v3198
    %v3200 = vpop.f32.mrf.mxu0
    %v3201 = vadd.f32 %v3160, %v3200
    %v3202 = vpop.f32.mrf.mxu0
    %v3203 = vpop.f32.mrf.mxu0
    %3204 = vdwg.mxu0
    %3205 = vmatprep.subr.bf16.mxu0 0
    %3206 = vmatpush1.bf16.msra.mxu0 %v2566
    %3207 = vmatprep.subr.bf16.mxu0 0
    %3208 = vmatpush1.bf16.msra.mxu0 %v2559
    %3209 = vmatprep.subr.bf16.mxu0 0
    %3210 = vmatpush1.bf16.msra.mxu0 %v2552
    %3211 = vmatprep.subr.bf16.mxu0 0
    %3212 = vmatpush1.bf16.msra.mxu0 %v2545
    %3213 = vmatprep.subr.bf16.mxu0 0
    %3214 = vmatpush1.bf16.msra.mxu0 %v2538
    %3215 = vmatprep.subr.bf16.mxu0 0
    %3216 = vmatpush1.bf16.msra.mxu0 %v2531
    %3217 = vmatprep.subr.bf16.mxu0 0
    %3218 = vmatpush1.bf16.msra.mxu0 %v2524
    %3219 = vmatprep.subr.bf16.mxu0 0
    %3220 = vmatpush1.bf16.msra.mxu0 %v2517
    %3221 = vmatprep.subr.bf16.mxu0 0
    %3222 = vmatpush2.bf16.msra.mxu0 %v2622
    %3223 = vmatprep.subr.bf16.mxu0 0
    %3224 = vmatpush2.bf16.msra.mxu0 %v2615
    %3225 = vmatprep.subr.bf16.mxu0 0
    %3226 = vmatpush2.bf16.msra.mxu0 %v2608
    %3227 = vmatprep.subr.bf16.mxu0 0
    %3228 = vmatpush2.bf16.msra.mxu0 %v2601
    %3229 = vmatprep.subr.bf16.mxu0 0
    %3230 = vmatpush2.bf16.msra.mxu0 %v2594
    %3231 = vmatprep.subr.bf16.mxu0 0
    %3232 = vmatpush2.bf16.msra.mxu0 %v2587
    %3233 = vmatprep.subr.bf16.mxu0 0
    %3234 = vmatpush2.bf16.msra.mxu0 %v2580
    %3235 = vmatprep.subr.bf16.mxu0 0
    %3236 = vmatpush2.bf16.msra.mxu0 %v2573
    %3237 = vmatprep.mubr.bf16.mxu0 %v1548
    %3238 = vmatmul.mubr.bf16.gmra.mxu0 %v1547
    %v3239 = vpop.f32.mrf.mxu0
    %v3240 = vadd.f32 0.0, %v3239
    %v3241 = vpop.f32.mrf.mxu0
    %v3242 = vpop.f32.mrf.mxu0
    %v3243 = vpop.f32.mrf.mxu0
    %3244 = vdwg.mxu0
    %3245 = vmatprep.subr.bf16.mxu0 0
    %3246 = vmatpush1.bf16.msra.mxu0 %v2678
    %3247 = vmatprep.subr.bf16.mxu0 0
    %3248 = vmatpush1.bf16.msra.mxu0 %v2671
    %3249 = vmatprep.subr.bf16.mxu0 0
    %3250 = vmatpush1.bf16.msra.mxu0 %v2664
    %3251 = vmatprep.subr.bf16.mxu0 0
    %3252 = vmatpush1.bf16.msra.mxu0 %v2657
    %3253 = vmatprep.subr.bf16.mxu0 0
    %3254 = vmatpush1.bf16.msra.mxu0 %v2650
    %3255 = vmatprep.subr.bf16.mxu0 0
    %3256 = vmatpush1.bf16.msra.mxu0 %v2643
    %3257 = vmatprep.subr.bf16.mxu0 0
    %3258 = vmatpush1.bf16.msra.mxu0 %v2636
    %3259 = vmatprep.subr.bf16.mxu0 0
    %3260 = vmatpush1.bf16.msra.mxu0 %v2629
    %3261 = vmatprep.subr.bf16.mxu0 0
    %3262 = vmatpush2.bf16.msra.mxu0 %v2734
    %3263 = vmatprep.subr.bf16.mxu0 0
    %3264 = vmatpush2.bf16.msra.mxu0 %v2727
    %3265 = vmatprep.subr.bf16.mxu0 0
    %3266 = vmatpush2.bf16.msra.mxu0 %v2720
    %3267 = vmatprep.subr.bf16.mxu0 0
    %3268 = vmatpush2.bf16.msra.mxu0 %v2713
    %3269 = vmatprep.subr.bf16.mxu0 0
    %3270 = vmatpush2.bf16.msra.mxu0 %v2706
    %3271 = vmatprep.subr.bf16.mxu0 0
    %3272 = vmatpush2.bf16.msra.mxu0 %v2699
    %3273 = vmatprep.subr.bf16.mxu0 0
    %3274 = vmatpush2.bf16.msra.mxu0 %v2692
    %3275 = vmatprep.subr.bf16.mxu0 0
    %3276 = vmatpush2.bf16.msra.mxu0 %v2685
    %3277 = vmatprep.mubr.bf16.mxu0 %v1550
    %3278 = vmatmul.mubr.bf16.gmra.mxu0 %v1549
    %v3279 = vpop.f32.mrf.mxu0
    %v3280 = vadd.f32 %v3240, %v3279
    %v3281 = vpop.f32.mrf.mxu0
    %v3282 = vpop.f32.mrf.mxu0
    %v3283 = vpop.f32.mrf.mxu0
    %3284 = vdwg.mxu0
    %v3285 = vld [vmem:[%s8] sm:$0xff]
    %v3287 = vlaneseq
    %v3288 = vshrl.u32 %v3287, 7
    %v3289 = vsub.s32 0, %v3288
    %v3290 = vrot.slane %v3285, %v3289
    %v3291 = vlaneseq
    %v3292 = vshrl.u32 %v3291, 7
    %v3293 = vsub.s32 1, %v3292
    %v3294 = vrot.slane %v3285, %v3293
    %v3295 = vlaneseq
    %v3296 = vshrl.u32 %v3295, 7
    %v3297 = vsub.s32 2, %v3296
    %v3298 = vrot.slane %v3285, %v3297
    %v3299 = vlaneseq
    %v3300 = vshrl.u32 %v3299, 7
    %v3301 = vsub.s32 3, %v3300
    %v3302 = vrot.slane %v3285, %v3301
    %v3303 = vlaneseq
    %v3304 = vshrl.u32 %v3303, 7
    %v3305 = vsub.s32 4, %v3304
    %v3306 = vrot.slane %v3285, %v3305
    %v3307 = vlaneseq
    %v3308 = vshrl.u32 %v3307, 7
    %v3309 = vsub.s32 5, %v3308
    %v3310 = vrot.slane %v3285, %v3309
    %v3311 = vlaneseq
    %v3312 = vshrl.u32 %v3311, 7
    %v3313 = vsub.s32 6, %v3312
    %v3314 = vrot.slane %v3285, %v3313
    %v3322 = vmul.f32 %v3035, %v3290
    %v3323 = vmul.f32 %v3037, %v3294
    %v3324 = vmul.f32 %v3117, %v3298
    %v3325 = vmul.f32 %v3119, %v3302
    %v3326 = vmul.f32 %v3199, %v3306
    %v3327 = vmul.f32 %v3201, %v3310
    %v3328 = vmul.f32 %v3280, %v3314
    %v3329 = vld [vmem:[%s9] sm:$0xff]
    %v3331 = vlaneseq
    %v3332 = vshrl.u32 %v3331, 7
    %v3333 = vsub.s32 0, %v3332
    %v3334 = vrot.slane %v3329, %v3333
    %v3335 = vlaneseq
    %v3336 = vshrl.u32 %v3335, 7
    %v3337 = vsub.s32 1, %v3336
    %v3338 = vrot.slane %v3329, %v3337
    %v3339 = vlaneseq
    %v3340 = vshrl.u32 %v3339, 7
    %v3341 = vsub.s32 2, %v3340
    %v3342 = vrot.slane %v3329, %v3341
    %v3343 = vlaneseq
    %v3344 = vshrl.u32 %v3343, 7
    %v3345 = vsub.s32 3, %v3344
    %v3346 = vrot.slane %v3329, %v3345
    %v3347 = vlaneseq
    %v3348 = vshrl.u32 %v3347, 7
    %v3349 = vsub.s32 4, %v3348
    %v3350 = vrot.slane %v3329, %v3349
    %v3351 = vlaneseq
    %v3352 = vshrl.u32 %v3351, 7
    %v3353 = vsub.s32 5, %v3352
    %v3354 = vrot.slane %v3329, %v3353
    %v3355 = vlaneseq
    %v3356 = vshrl.u32 %v3355, 7
    %v3357 = vsub.s32 6, %v3356
    %v3358 = vrot.slane %v3329, %v3357
    %v3366 = vadd.f32 %v3322, %v3334
    %v3367 = vadd.f32 %v3323, %v3338
    %v3368 = vadd.f32 %v3324, %v3342
    %v3369 = vadd.f32 %v3325, %v3346
    %v3370 = vadd.f32 %v3326, %v3350
    %v3371 = vadd.f32 %v3327, %v3354
    %v3372 = vadd.f32 %v3328, %v3358
    %v3373 = vxor.u32 %v3366, 2147483648
    %v3374 = vxor.u32 %v3367, 2147483648
    %v3375 = vxor.u32 %v3368, 2147483648
    %v3376 = vxor.u32 %v3369, 2147483648
    %v3377 = vxor.u32 %v3370, 2147483648
    %v3378 = vxor.u32 %v3371, 2147483648
    %v3379 = vxor.u32 %v3372, 2147483648
    %v3380 = vmul.f32 %v3373, 1.442695
    %v3381 = vpow.pop %v3380
    %v3382 = vmul.f32 %v3374, 1.442695
    %v3383 = vpow.pop %v3382
    %v3384 = vmul.f32 %v3375, 1.442695
    %v3385 = vpow.pop %v3384
    %v3386 = vmul.f32 %v3376, 1.442695
    %v3387 = vpow.pop %v3386
    %v3388 = vmul.f32 %v3377, 1.442695
    %v3389 = vpow.pop %v3388
    %v3390 = vmul.f32 %v3378, 1.442695
    %v3391 = vpow.pop %v3390
    %v3392 = vmul.f32 %v3379, 1.442695
    %v3393 = vpow.pop %v3392
    %v3394 = vadd.f32 %v3381, 1.0
    %v3395 = vadd.f32 %v3383, 1.0
    %v3396 = vadd.f32 %v3385, 1.0
    %v3397 = vadd.f32 %v3387, 1.0
    %v3398 = vadd.f32 %v3389, 1.0
    %v3399 = vadd.f32 %v3391, 1.0
    %v3400 = vadd.f32 %v3393, 1.0
    %v3401 = vrcp.pop %v3394
    %v3402 = vmul.f32 1.0, %v3401
    %v3403 = vrcp.pop %v3395
    %v3404 = vmul.f32 1.0, %v3403
    %v3405 = vrcp.pop %v3396
    %v3406 = vmul.f32 1.0, %v3405
    %v3407 = vrcp.pop %v3397
    %v3408 = vmul.f32 1.0, %v3407
    %v3409 = vrcp.pop %v3398
    %v3410 = vmul.f32 1.0, %v3409
    %v3411 = vrcp.pop %v3399
    %v3412 = vmul.f32 1.0, %v3411
    %v3413 = vrcp.pop %v3400
    %v3414 = vmul.f32 1.0, %v3413
    %v3415 = vpack.c.bf16 %v3402, %v3402
    %v3416 = vpack.c.bf16 %v3404, %v3404
    %v3417 = vpack.c.bf16 %v3406, %v3406
    %v3418 = vpack.c.bf16 %v3408, %v3408
    %v3419 = vpack.c.bf16 %v3410, %v3410
    %v3420 = vpack.c.bf16 %v3412, %v3412
    %v3421 = vpack.c.bf16 %v3414, %v3414
    %v3429 = vunpack.c.l.b16 %v3415
    %v3430 = vunpack.c.l.b16 %v3416
    %v3431 = vunpack.c.l.b16 %v3417
    %v3432 = vunpack.c.l.b16 %v3418
    %v3433 = vunpack.c.l.b16 %v3419
    %v3434 = vunpack.c.l.b16 %v3420
    %v3435 = vunpack.c.l.b16 %v3421
    %v3436 = vpack.c.b16 %v3430, %v3429
    %v3437 = vpack.c.b16 %v3432, %v3431
    %v3438 = vpack.c.b16 %v3434, %v3433
    %v3439 = vpack.c.b16 %v3435, %v3435
    %3444 = vst [vmem:[%s10] sm:$0xff] %v3436
    %3445 = vst [vmem:[%s10 + $0x8] sm:$0xff] %v3437
    %3446 = vst [vmem:[%s10 + $0x10] sm:$0xff] %v3438
    %3447 = vst [vmem:[%s10 + $0x18] sm:$0xf] %v3439
    // Predicated region
    $region66: #{wn_generator_forward_prepared.1} parent=1 // pred_check
      _
    $region67: #{wn_generator_forward_prepared.1} parent=1 // pred_check_branch
      %3449 = sbr.rel (0) target = $region69
    $region68: #{wn_generator_forward_prepared.1} parent=1 // pred_region
      _
    $region69: #{wn_generator_forward_prepared.1} parent=1 // pred_fallthru
      _
    // Predicated region
    $region70: #{wn_generator_forward_prepared.1} parent=1 // pred_check
      _
    $region71: #{wn_generator_forward_prepared.1} parent=1 // pred_check_branch
      %3451 = sbr.rel (0) target = $region73
    $region72: #{wn_generator_forward_prepared.1} parent=1 // pred_region
      _
    $region73: #{wn_generator_forward_prepared.1} parent=1 // pred_fallthru
      _
    %3452 = vsyncpa [#allocation3], 1
    %3453 = vsyncpa [#allocation5], 1
    %3454 = vsyncpa [#allocation8], 1
    %3455 = vsyncpa [#allocation11], 1

</llo_original>
